<compile_context>
chip_gen: v5e
topology: v5e:2x2
jax: 0.10.0
libtpu: 0.0.40
codegen_flags: <defaults>
</compile_context>

<pallas_src>
import functools

import jax
import jax.numpy as jnp
from jax.experimental import pallas as pl
from jax.experimental.pallas import tpu as pltpu

KSIZE = 7
PAD = (KSIZE - 1) // 2
NTAPS = KSIZE * KSIZE
_MIB = 1024 * 1024


def _cbam_kernel(x_ref, w1t_ref, b1_ref, w2t_ref, b2_ref, wmask_ref, bn_ref,
                 o_ref, *, H, W, HWP, elem_dtype):
    HW = H * W
    f32 = jnp.float32
    x = x_ref[...]                                      # (bt, C, HWP), native dtype
    bt, C, _ = x.shape

    # ---------------- ChannelGate ----------------
    # Global avg / max pool over the (possibly zero-padded) spatial lanes.
    avg_p = jnp.sum(x, axis=-1, dtype=f32) * (1.0 / HW)            # (bt, C)
    if HWP != HW:
        lane = jax.lax.broadcasted_iota(jnp.int32, (1, 1, HWP), 2)
        x_for_max = jnp.where(lane < HW, x, jnp.asarray(-jnp.inf, x.dtype))
    else:
        x_for_max = x
    max_p = jnp.max(x_for_max, axis=-1).astype(f32)                # (bt, C)

    pooled = jnp.concatenate([avg_p, max_p], axis=0)               # (2*bt, C)
    h = jnp.dot(pooled, w1t_ref[...], preferred_element_type=f32)
    h = jnp.maximum(h + b1_ref[...], 0.0)                          # (2*bt, hid)
    att = jnp.dot(h, w2t_ref[...], preferred_element_type=f32) + b2_ref[...]
    ch_scale = jax.nn.sigmoid(att[:bt] + att[bt:])                 # (bt, C) f32
    ch_e = ch_scale.astype(elem_dtype)[:, :, None]                 # (bt, C, 1)

    # ---------------- SpatialGate ----------------
    # Channel max / mean of x * ch_scale as streaming reductions; the scaled
    # block dies here (it is recomputed at the final store, not kept live
    # across the 49-tap conv).
    prod = x.astype(elem_dtype) * ch_e                             # transient
    mx = jnp.max(prod, axis=1).astype(f32)                         # (bt, HWP)
    mn = jnp.sum(prod, axis=1, dtype=f32) * (1.0 / C)              # (bt, HWP)
    stacked = jnp.concatenate([mx, mn], axis=1)                    # (bt, 2*HWP)

    # 7x7 "same" conv in flat lane layout: ONE lane roll per tap on the
    # lane-concatenated [max | mean] maps; zero padding + tap weights live in
    # the precomputed wmask rows (wrap-around / cross-half reads always hit a
    # zero weight).  Seven accumulators break the 49-add dependency chain.
    L = 2 * HWP
    accs = []
    for kh in range(KSIZE):
        dr = kh - PAD
        acc = None
        for kw in range(KSIZE):
            dc = kw - PAD
            shift = (-(dr * W + dc)) % L
            tap = kh * KSIZE + kw
            r = pltpu.roll(stacked, shift, axis=1) if shift else stacked
            term = r * wmask_ref[tap]
            acc = term if acc is None else acc + term
        accs.append(acc)
    total = accs[0]
    for kh in range(1, KSIZE):
        total = total + accs[kh]                                   # (bt, 2*HWP)
    conv = total[:, :HWP] + total[:, HWP:]                         # (bt, HWP)

    sp_scale = jax.nn.sigmoid(conv * bn_ref[0] + bn_ref[1])        # (bt, HWP)
    sp_e = sp_scale.astype(elem_dtype)[:, None, :]

    # Apply both gates at the final store (no long-lived scaled intermediate).
    o_ref[...] = (x.astype(elem_dtype) * ch_e * sp_e).astype(o_ref.dtype)


def _build_conv_wmask(wsp, H, W, HWP):
    """Per-tap conv weights with the 'same' zero padding folded in.

    Row kh*7+kw = [valid(p)*w_max(tap) for p in range(HWP)] ++
                  [valid(p)*w_mean(tap) for p in range(HWP)],
    matching the kernel's lane-concatenated [max | mean] channel-pool maps.
    Pad lanes (p >= H*W) carry zero weight.
    """
    wsp = jnp.asarray(wsp, jnp.float32).reshape(2, KSIZE, KSIZE)
    HW = H * W
    ii = jnp.repeat(jnp.arange(H), W)                  # output row index (HW,)
    jj = jnp.tile(jnp.arange(W), H)                    # output col index (HW,)
    rows = []
    for kh in range(KSIZE):
        dr = kh - PAD
        for kw in range(KSIZE):
            dc = kw - PAD
            valid = ((ii + dr >= 0) & (ii + dr < H) &
                     (jj + dc >= 0) & (jj + dc < W))
            parts = []
            for c in range(2):                         # c=0: channel-max, c=1: mean
                r = jnp.where(valid, wsp[c, kh, kw], 0.0)
                if HWP != HW:
                    r = jnp.pad(r, (0, HWP - HW))
                parts.append(r)
            rows.append(jnp.concatenate(parts, axis=0))
    return jnp.stack(rows, axis=0)                     # (49, 2*HWP) float32


def _tpu_params():
    """(vmem_capacity_bytes, tensorcores_sharing_the_grid, device_kind)."""
    vmem_cap = 64 * _MIB                               # conservative floor (v7x)
    num_tc = 1
    kind = ""
    try:
        kind = jax.devices()[0].device_kind or ""
    except Exception:
        pass
    k = kind.lower()
    if "v5" in k or "v6" in k:
        vmem_cap = 128 * _MIB                          # v5e / v6e physical VMEM
    if "7" in k:
        vmem_cap, num_tc = 64 * _MIB, 2                # v7x: 64 MiB/TC, 2 TCs
    try:
        cap = getattr(pltpu.get_tpu_info(), "vmem_capacity_bytes", None)
        if cap:
            vmem_cap = int(cap)
    except Exception:
        pass
    return vmem_cap, num_tc, kind


def _vmem_estimate(bt, C, HWP, in_itemsize, hid):
    """Working-set estimate: double-buffered in/out blocks + f32 transients +
    wmask (and its pipeline copy) + MLP weights + conv maps + slack."""
    blk = bt * C * HWP
    est = 2 * blk * in_itemsize                        # input block x2
    est += 2 * blk * in_itemsize                       # output block x2
    est += 2 * blk * 4                                 # scaled-product / store transients
    est += 2 * NTAPS * 2 * HWP * 4                     # wmask + pipeline copy
    est += 4 * (2 * C * hid + hid + C) * 4             # MLP weights/biases (+ copies)
    est += 20 * bt * 2 * HWP * 4                       # conv maps, accs, rolled temps
    est += 2 * _MIB                                    # slack
    return int(est)


def _pick_block_batch(B, per_image_bytes, target_bytes, num_tc):
    cap = max(1, min(B, int(target_bytes) // max(1, per_image_bytes)))
    if num_tc > 1 and B >= num_tc:
        cap = min(cap, max(1, B // num_tc))            # keep >= num_tc grid steps
    divisors = [d for d in range(1, cap + 1) if B % d == 0]
    if num_tc > 1:
        balanced = [d for d in divisors if (B // d) % num_tc == 0]
        if balanced:                                   # no TC idles on a tail step
            return balanced[-1]
    return divisors[-1]


def cbam_pallas(x, w1, b1, w2, b2, wsp, bn_scale, bn_shift, *, block_batch=None):
    B, C, H, W = x.shape
    hid = w1.shape[0]
    if hid < 1:
        raise ValueError("gate_channels // reduction_ratio must be >= 1")
    HW = H * W
    HWP = ((HW + 127) // 128) * 128                    # lane-dense spatial axis

    x3 = x.reshape(B, C, HW)
    if HWP != HW:
        x3 = jnp.pad(x3, ((0, 0), (0, 0), (0, HWP - HW)))   # zero pad lanes

    w1t = jnp.asarray(w1, jnp.float32).T               # (C, hid)
    w2t = jnp.asarray(w2, jnp.float32).T               # (hid, C)
    b1r = jnp.asarray(b1, jnp.float32).reshape(1, hid)
    b2r = jnp.asarray(b2, jnp.float32).reshape(1, C)
    wmask = _build_conv_wmask(wsp, H, W, HWP)          # (49, 2*HWP)
    bn = jnp.array([bn_scale, bn_shift], jnp.float32)

    vmem_cap, num_tc, kind = _tpu_params()
    # v6e/v7x have bf16 VALUs: keep the big elementwise path in bf16 there;
    # keep f32 on v5e/v4 (no bf16 VPU).  Reductions stay in f32 regardless.
    k = kind.lower()
    if x.dtype == jnp.bfloat16 and "v5" not in k and "v4" not in k:
        elem_dtype = jnp.bfloat16
    else:
        elem_dtype = jnp.float32

    budget = (vmem_cap * 7) // 10                      # headroom for Mosaic internals
    target = 6 * _MIB if vmem_cap >= 96 * _MIB else 3 * _MIB
    per_image = C * HWP * x.dtype.itemsize
    if block_batch is not None:
        if B % block_batch:
            raise ValueError("block_batch must divide the batch size")
        bt = int(block_batch)
    else:
        bt = _pick_block_batch(B, per_image, target, num_tc)
        while bt > 1 and _vmem_estimate(bt, C, HWP, x.dtype.itemsize, hid) > budget:
            bt -= 1
            while B % bt:
                bt -= 1
    grid = (B // bt,)

    est = _vmem_estimate(bt, C, HWP, x.dtype.itemsize, hid)
    vmem_limit = int(min(vmem_cap * 9 // 10, max(16 * _MIB, est)))

    # Advisory cost hint: the kernel is HBM-bound (read + write of x).
    cost = pl.CostEstimate(
        flops=int(B * (6 * C * HW + 4 * NTAPS * HW + 4 * C * hid)),
        transcendentals=int(B * (C + HW)),
        bytes_accessed=int(2 * B * C * HWP * x.dtype.itemsize + wmask.size * 4))

    kernel = functools.partial(_cbam_kernel, H=H, W=W, HWP=HWP,
                               elem_dtype=elem_dtype)
    # NOTE: pipeline_mode=pl.Buffered(1) on the constant-index resident blocks
    # would drop their second pipeline copy; default buffering is kept for
    # portability and the VMEM budget above accounts for both copies.
    out3 = pl.pallas_call(
        kernel,
        out_shape=jax.ShapeDtypeStruct((B, C, HWP), x.dtype),
        grid=grid,
        in_specs=[
            pl.BlockSpec((bt, C, HWP), lambda b: (b, 0, 0)),     # x
            pl.BlockSpec((C, hid), lambda b: (0, 0)),            # w1.T  (resident)
            pl.BlockSpec((1, hid), lambda b: (0, 0)),            # b1    (resident)
            pl.BlockSpec((hid, C), lambda b: (0, 0)),            # w2.T  (resident)
            pl.BlockSpec((1, C), lambda b: (0, 0)),              # b2    (resident)
            pl.BlockSpec((NTAPS, 2 * HWP), lambda b: (0, 0)),    # masked conv taps
            pl.BlockSpec(memory_space=pltpu.MemorySpace.SMEM),   # bn scale/shift
        ],
        out_specs=pl.BlockSpec((bt, C, HWP), lambda b: (b, 0, 0)),
        compiler_params=pltpu.CompilerParams(
            dimension_semantics=("parallel",),
            vmem_limit_bytes=vmem_limit),
        cost_estimate=cost,
    )(x3, w1t, b1r, w2t, b2r, wmask, bn)

    if HWP != HW:
        out3 = out3[:, :, :HW]
    return out3.reshape(B, C, H, W)


def cbam_ref(x, w1, b1, w2, b2, wsp, bn_scale, bn_shift):
    """Pure-JAX reference matching the PyTorch forward semantics."""
    B, C, H, W = x.shape
    xf = x.reshape(B, C, H * W)
    avg_p = xf.mean(-1)
    max_p = xf.max(-1)

    def mlp(v):
        h = jnp.maximum(v @ w1.T + b1, 0.0)
        return h @ w2.T + b2

    att = mlp(avg_p) + mlp(max_p)
    ch = jax.nn.sigmoid(att)[:, :, None, None]
    x_cg = x * ch

    mx = x_cg.max(axis=1, keepdims=True)
    mn = x_cg.mean(axis=1, keepdims=True)
    pooled = jnp.concatenate([mx, mn], axis=1)
    conv = jax.lax.conv_general_dilated(
        pooled, wsp, window_strides=(1, 1), padding=((PAD, PAD), (PAD, PAD)),
        dimension_numbers=("NCHW", "OIHW", "NCHW"))
    sp = jax.nn.sigmoid(conv * bn_scale + bn_shift)
    return x_cg * sp


if __name__ == "__main__":
    def run_case(B, C, H, W, reduction_ratio, key):
        hid = max(1, C // reduction_ratio)
        k = jax.random.split(key, 6)
        x = jax.random.normal(k[0], (B, C, H, W), jnp.float32)
        w1 = jax.random.normal(k[1], (hid, C), jnp.float32) * 0.2     # Linear(C -> C//r)
        b1 = jax.random.normal(k[2], (hid,), jnp.float32) * 0.1
        w2 = jax.random.normal(k[3], (C, hid), jnp.float32) * 0.2     # Linear(C//r -> C)
        b2 = jax.random.normal(k[4], (C,), jnp.float32) * 0.1
        wsp = jax.random.normal(k[5], (1, 2, KSIZE, KSIZE), jnp.float32) * 0.1
        # eval-mode BatchNorm2d(1) with default init: y = x / sqrt(1 + eps)
        bn_scale = 1.0 / float(jnp.sqrt(1.0 + 1e-5))
        bn_shift = 0.0

        out = jax.block_until_ready(
            cbam_pallas(x, w1, b1, w2, b2, wsp, bn_scale, bn_shift))
        ref = cbam_ref(x, w1, b1, w2, b2, wsp, bn_scale, bn_shift)
        if not jnp.allclose(out, ref, atol=2e-3, rtol=2e-3):
            raise AssertionError(
                f"mismatch (B={B},C={C},H={H},W={W}), "
                f"max abs err = {jnp.max(jnp.abs(out - ref))}")

    keys = jax.random.split(jax.random.PRNGKey(0), 2)
    run_case(2, 32, 16, 16, 16, keys[0])   # HW = 256: already lane-aligned path
    run_case(2, 16, 14, 14, 4, keys[1])    # HW = 196 -> padded to 256: pad path
    print("KERNEL_OK")
</pallas_src>

<mosaic_0001>
module attributes {stable_mosaic.version = 11 : i64} {
  func.func @_cbam_kernel(%arg0: i32, %arg1: memref<2x32x256xf32, #tpu.memory_space<vmem>>, %arg2: memref<32x2xf32, #tpu.memory_space<vmem>>, %arg3: memref<1x2xf32, #tpu.memory_space<vmem>>, %arg4: memref<2x32xf32, #tpu.memory_space<vmem>>, %arg5: memref<1x32xf32, #tpu.memory_space<vmem>>, %arg6: memref<49x512xf32, #tpu.memory_space<vmem>>, %arg7: memref<2xf32, #tpu.memory_space<smem>>, %arg8: memref<2x32x256xf32, #tpu.memory_space<vmem>>) attributes {dimension_semantics = [#tpu.dimension_semantics<parallel>], iteration_bounds = array<i64: 1>, scalar_prefetch = 0 : i64, scratch_operands = 0 : i64, tpu.core_type = #tpu.core_type<tc>, window_params = [{transform_indices = @transform_0, window_bounds = array<i64: 2, 32, 256>}, {pipeline_mode = #tpu.pipeline_mode<synchronous>, transform_indices = @transform_1, window_bounds = array<i64: 32, 2>}, {pipeline_mode = #tpu.pipeline_mode<synchronous>, transform_indices = @transform_2, window_bounds = array<i64: 1, 2>}, {pipeline_mode = #tpu.pipeline_mode<synchronous>, transform_indices = @transform_3, window_bounds = array<i64: 2, 32>}, {pipeline_mode = #tpu.pipeline_mode<synchronous>, transform_indices = @transform_4, window_bounds = array<i64: 1, 32>}, {pipeline_mode = #tpu.pipeline_mode<synchronous>, transform_indices = @transform_5, window_bounds = array<i64: 49, 512>}, {transform_indices = @transform_6, window_bounds = array<i64: 2>}, {transform_indices = @transform_7, window_bounds = array<i64: 2, 32, 256>}]} {
    %c0 = arith.constant 0 : index
    %c0_0 = arith.constant 0 : index
    %c0_1 = arith.constant 0 : index
    %0 = vector.load %arg1[%c0, %c0_0, %c0_1] : memref<2x32x256xf32, #tpu.memory_space<vmem>>, vector<2x32x256xf32>
    %cst = arith.constant dense<0.000000e+00> : vector<2x32xf32>
    %1 = vector.multi_reduction <add>, %0, %cst [2] : vector<2x32x256xf32> to vector<2x32xf32>
    %cst_2 = arith.constant 3.906250e-03 : f32
    %2 = vector.broadcast %cst_2 : f32 to vector<2x32xf32>
    %3 = arith.mulf %1, %2 : vector<2x32xf32>
    %cst_3 = arith.constant dense<0xFF800000> : vector<2x32xf32>
    %4 = vector.multi_reduction <maximumf>, %0, %cst_3 [2] : vector<2x32x256xf32> to vector<2x32xf32>
    %5 = tpu.concatenate %3, %4 in 0 : vector<2x32xf32>, vector<2x32xf32> -> vector<4x32xf32>
    %c0_4 = arith.constant 0 : index
    %c0_5 = arith.constant 0 : index
    %6 = vector.load %arg2[%c0_4, %c0_5] : memref<32x2xf32, #tpu.memory_space<vmem>>, vector<32x2xf32>
    %cst_6 = arith.constant dense<0.000000e+00> : vector<4x2xf32>
    %7 = tpu.matmul %5, %6, %cst_6 {dimension_numbers = #tpu.dot_dimension_numbers<[1], [0], [0], [1], [0, 0, 1, 1], [], []>} : vector<4x32xf32>, vector<32x2xf32>, vector<4x2xf32> -> vector<4x2xf32>
    %c0_7 = arith.constant 0 : index
    %c0_8 = arith.constant 0 : index
    %8 = vector.load %arg3[%c0_7, %c0_8] : memref<1x2xf32, #tpu.memory_space<vmem>>, vector<1x2xf32>
    %9 = vector.broadcast %8 : vector<1x2xf32> to vector<4x2xf32>
    %10 = arith.addf %7, %9 : vector<4x2xf32>
    %cst_9 = arith.constant 0.000000e+00 : f32
    %11 = vector.broadcast %cst_9 : f32 to vector<4x2xf32>
    %12 = arith.maximumf %10, %11 : vector<4x2xf32>
    %c0_10 = arith.constant 0 : index
    %c0_11 = arith.constant 0 : index
    %13 = vector.load %arg4[%c0_10, %c0_11] : memref<2x32xf32, #tpu.memory_space<vmem>>, vector<2x32xf32>
    %cst_12 = arith.constant dense<0.000000e+00> : vector<4x32xf32>
    %14 = tpu.matmul %12, %13, %cst_12 {dimension_numbers = #tpu.dot_dimension_numbers<[1], [0], [0], [1], [0, 0, 1, 1], [], []>} : vector<4x2xf32>, vector<2x32xf32>, vector<4x32xf32> -> vector<4x32xf32>
    %c0_13 = arith.constant 0 : index
    %c0_14 = arith.constant 0 : index
    %15 = vector.load %arg5[%c0_13, %c0_14] : memref<1x32xf32, #tpu.memory_space<vmem>>, vector<1x32xf32>
    %16 = vector.broadcast %15 : vector<1x32xf32> to vector<4x32xf32>
    %17 = arith.addf %14, %16 : vector<4x32xf32>
    %18 = vector.extract_strided_slice %17 {offsets = [0, 0], sizes = [2, 32], strides = [1, 1]} : vector<4x32xf32> to vector<2x32xf32>
    %19 = vector.extract_strided_slice %17 {offsets = [2, 0], sizes = [2, 32], strides = [1, 1]} : vector<4x32xf32> to vector<2x32xf32>
    %20 = arith.addf %18, %19 : vector<2x32xf32>
    %21 = arith.negf %20 : vector<2x32xf32>
    %22 = math.exp %21 : vector<2x32xf32>
    %cst_15 = arith.constant 1.000000e+00 : f32
    %23 = vector.broadcast %cst_15 : f32 to vector<2x32xf32>
    %24 = arith.addf %23, %22 : vector<2x32xf32>
    %25 = arith.divf %23, %24 : vector<2x32xf32>
    %26 = vector.shape_cast %25 : vector<2x32xf32> to vector<2x32x1xf32>
    %27 = vector.broadcast %26 : vector<2x32x1xf32> to vector<2x32x256xf32>
    %28 = arith.mulf %0, %27 : vector<2x32x256xf32>
    %cst_16 = arith.constant dense<0xFF800000> : vector<2x256xf32>
    %29 = vector.multi_reduction <maximumf>, %28, %cst_16 [1] : vector<2x32x256xf32> to vector<2x256xf32>
    %cst_17 = arith.constant dense<0.000000e+00> : vector<2x256xf32>
    %30 = vector.multi_reduction <add>, %28, %cst_17 [1] : vector<2x32x256xf32> to vector<2x256xf32>
    %cst_18 = arith.constant 3.125000e-02 : f32
    %31 = vector.broadcast %cst_18 : f32 to vector<2x256xf32>
    %32 = arith.mulf %30, %31 : vector<2x256xf32>
    %33 = tpu.concatenate %29, %32 in 1 : vector<2x256xf32>, vector<2x256xf32> -> vector<2x512xf32>
    %c51_i32 = arith.constant 51 : i32
    %34 = tpu.dynamic_rotate %33 by %c51_i32 dim 1 : vector<2x512xf32>, i32 -> vector<2x512xf32>
    %c0_19 = arith.constant 0 : index
    %c0_20 = arith.constant 0 : index
    %35 = vector.load %arg6[%c0_19, %c0_20] : memref<49x512xf32, #tpu.memory_space<vmem>>, vector<1x512xf32>
    %36 = vector.shape_cast %35 : vector<1x512xf32> to vector<512xf32>
    %37 = vector.shape_cast %36 : vector<512xf32> to vector<1x512xf32>
    %38 = vector.broadcast %37 : vector<1x512xf32> to vector<2x512xf32>
    %39 = arith.mulf %34, %38 : vector<2x512xf32>
    %c50_i32 = arith.constant 50 : i32
    %40 = tpu.dynamic_rotate %33 by %c50_i32 dim 1 : vector<2x512xf32>, i32 -> vector<2x512xf32>
    %c1 = arith.constant 1 : index
    %c0_21 = arith.constant 0 : index
    %41 = vector.load %arg6[%c1, %c0_21] : memref<49x512xf32, #tpu.memory_space<vmem>>, vector<1x512xf32>
    %42 = vector.shape_cast %41 : vector<1x512xf32> to vector<512xf32>
    %43 = vector.shape_cast %42 : vector<512xf32> to vector<1x512xf32>
    %44 = vector.broadcast %43 : vector<1x512xf32> to vector<2x512xf32>
    %45 = arith.mulf %40, %44 : vector<2x512xf32>
    %46 = arith.addf %39, %45 : vector<2x512xf32>
    %c49_i32 = arith.constant 49 : i32
    %47 = tpu.dynamic_rotate %33 by %c49_i32 dim 1 : vector<2x512xf32>, i32 -> vector<2x512xf32>
    %c2 = arith.constant 2 : index
    %c0_22 = arith.constant 0 : index
    %48 = vector.load %arg6[%c2, %c0_22] : memref<49x512xf32, #tpu.memory_space<vmem>>, vector<1x512xf32>
    %49 = vector.shape_cast %48 : vector<1x512xf32> to vector<512xf32>
    %50 = vector.shape_cast %49 : vector<512xf32> to vector<1x512xf32>
    %51 = vector.broadcast %50 : vector<1x512xf32> to vector<2x512xf32>
    %52 = arith.mulf %47, %51 : vector<2x512xf32>
    %53 = arith.addf %46, %52 : vector<2x512xf32>
    %c48_i32 = arith.constant 48 : i32
    %54 = tpu.dynamic_rotate %33 by %c48_i32 dim 1 : vector<2x512xf32>, i32 -> vector<2x512xf32>
    %c3 = arith.constant 3 : index
    %c0_23 = arith.constant 0 : index
    %55 = vector.load %arg6[%c3, %c0_23] : memref<49x512xf32, #tpu.memory_space<vmem>>, vector<1x512xf32>
    %56 = vector.shape_cast %55 : vector<1x512xf32> to vector<512xf32>
    %57 = vector.shape_cast %56 : vector<512xf32> to vector<1x512xf32>
    %58 = vector.broadcast %57 : vector<1x512xf32> to vector<2x512xf32>
    %59 = arith.mulf %54, %58 : vector<2x512xf32>
    %60 = arith.addf %53, %59 : vector<2x512xf32>
    %c47_i32 = arith.constant 47 : i32
    %61 = tpu.dynamic_rotate %33 by %c47_i32 dim 1 : vector<2x512xf32>, i32 -> vector<2x512xf32>
    %c4 = arith.constant 4 : index
    %c0_24 = arith.constant 0 : index
    %62 = vector.load %arg6[%c4, %c0_24] : memref<49x512xf32, #tpu.memory_space<vmem>>, vector<1x512xf32>
    %63 = vector.shape_cast %62 : vector<1x512xf32> to vector<512xf32>
    %64 = vector.shape_cast %63 : vector<512xf32> to vector<1x512xf32>
    %65 = vector.broadcast %64 : vector<1x512xf32> to vector<2x512xf32>
    %66 = arith.mulf %61, %65 : vector<2x512xf32>
    %67 = arith.addf %60, %66 : vector<2x512xf32>
    %c46_i32 = arith.constant 46 : i32
    %68 = tpu.dynamic_rotate %33 by %c46_i32 dim 1 : vector<2x512xf32>, i32 -> vector<2x512xf32>
    %c5 = arith.constant 5 : index
    %c0_25 = arith.constant 0 : index
    %69 = vector.load %arg6[%c5, %c0_25] : memref<49x512xf32, #tpu.memory_space<vmem>>, vector<1x512xf32>
    %70 = vector.shape_cast %69 : vector<1x512xf32> to vector<512xf32>
    %71 = vector.shape_cast %70 : vector<512xf32> to vector<1x512xf32>
    %72 = vector.broadcast %71 : vector<1x512xf32> to vector<2x512xf32>
    %73 = arith.mulf %68, %72 : vector<2x512xf32>
    %74 = arith.addf %67, %73 : vector<2x512xf32>
    %c45_i32 = arith.constant 45 : i32
    %75 = tpu.dynamic_rotate %33 by %c45_i32 dim 1 : vector<2x512xf32>, i32 -> vector<2x512xf32>
    %c6 = arith.constant 6 : index
    %c0_26 = arith.constant 0 : index
    %76 = vector.load %arg6[%c6, %c0_26] : memref<49x512xf32, #tpu.memory_space<vmem>>, vector<1x512xf32>
    %77 = vector.shape_cast %76 : vector<1x512xf32> to vector<512xf32>
    %78 = vector.shape_cast %77 : vector<512xf32> to vector<1x512xf32>
    %79 = vector.broadcast %78 : vector<1x512xf32> to vector<2x512xf32>
    %80 = arith.mulf %75, %79 : vector<2x512xf32>
    %81 = arith.addf %74, %80 : vector<2x512xf32>
    %c35_i32 = arith.constant 35 : i32
    %82 = tpu.dynamic_rotate %33 by %c35_i32 dim 1 : vector<2x512xf32>, i32 -> vector<2x512xf32>
    %c7 = arith.constant 7 : index
    %c0_27 = arith.constant 0 : index
    %83 = vector.load %arg6[%c7, %c0_27] : memref<49x512xf32, #tpu.memory_space<vmem>>, vector<1x512xf32>
    %84 = vector.shape_cast %83 : vector<1x512xf32> to vector<512xf32>
    %85 = vector.shape_cast %84 : vector<512xf32> to vector<1x512xf32>
    %86 = vector.broadcast %85 : vector<1x512xf32> to vector<2x512xf32>
    %87 = arith.mulf %82, %86 : vector<2x512xf32>
    %c34_i32 = arith.constant 34 : i32
    %88 = tpu.dynamic_rotate %33 by %c34_i32 dim 1 : vector<2x512xf32>, i32 -> vector<2x512xf32>
    %c8 = arith.constant 8 : index
    %c0_28 = arith.constant 0 : index
    %89 = vector.load %arg6[%c8, %c0_28] : memref<49x512xf32, #tpu.memory_space<vmem>>, vector<1x512xf32>
    %90 = vector.shape_cast %89 : vector<1x512xf32> to vector<512xf32>
    %91 = vector.shape_cast %90 : vector<512xf32> to vector<1x512xf32>
    %92 = vector.broadcast %91 : vector<1x512xf32> to vector<2x512xf32>
    %93 = arith.mulf %88, %92 : vector<2x512xf32>
    %94 = arith.addf %87, %93 : vector<2x512xf32>
    %c33_i32 = arith.constant 33 : i32
    %95 = tpu.dynamic_rotate %33 by %c33_i32 dim 1 : vector<2x512xf32>, i32 -> vector<2x512xf32>
    %c9 = arith.constant 9 : index
    %c0_29 = arith.constant 0 : index
    %96 = vector.load %arg6[%c9, %c0_29] : memref<49x512xf32, #tpu.memory_space<vmem>>, vector<1x512xf32>
    %97 = vector.shape_cast %96 : vector<1x512xf32> to vector<512xf32>
    %98 = vector.shape_cast %97 : vector<512xf32> to vector<1x512xf32>
    %99 = vector.broadcast %98 : vector<1x512xf32> to vector<2x512xf32>
    %100 = arith.mulf %95, %99 : vector<2x512xf32>
    %101 = arith.addf %94, %100 : vector<2x512xf32>
    %c32_i32 = arith.constant 32 : i32
    %102 = tpu.dynamic_rotate %33 by %c32_i32 dim 1 : vector<2x512xf32>, i32 -> vector<2x512xf32>
    %c10 = arith.constant 10 : index
    %c0_30 = arith.constant 0 : index
    %103 = vector.load %arg6[%c10, %c0_30] : memref<49x512xf32, #tpu.memory_space<vmem>>, vector<1x512xf32>
    %104 = vector.shape_cast %103 : vector<1x512xf32> to vector<512xf32>
    %105 = vector.shape_cast %104 : vector<512xf32> to vector<1x512xf32>
    %106 = vector.broadcast %105 : vector<1x512xf32> to vector<2x512xf32>
    %107 = arith.mulf %102, %106 : vector<2x512xf32>
    %108 = arith.addf %101, %107 : vector<2x512xf32>
    %c31_i32 = arith.constant 31 : i32
    %109 = tpu.dynamic_rotate %33 by %c31_i32 dim 1 : vector<2x512xf32>, i32 -> vector<2x512xf32>
    %c11 = arith.constant 11 : index
    %c0_31 = arith.constant 0 : index
    %110 = vector.load %arg6[%c11, %c0_31] : memref<49x512xf32, #tpu.memory_space<vmem>>, vector<1x512xf32>
    %111 = vector.shape_cast %110 : vector<1x512xf32> to vector<512xf32>
    %112 = vector.shape_cast %111 : vector<512xf32> to vector<1x512xf32>
    %113 = vector.broadcast %112 : vector<1x512xf32> to vector<2x512xf32>
    %114 = arith.mulf %109, %113 : vector<2x512xf32>
    %115 = arith.addf %108, %114 : vector<2x512xf32>
    %c30_i32 = arith.constant 30 : i32
    %116 = tpu.dynamic_rotate %33 by %c30_i32 dim 1 : vector<2x512xf32>, i32 -> vector<2x512xf32>
    %c12 = arith.constant 12 : index
    %c0_32 = arith.constant 0 : index
    %117 = vector.load %arg6[%c12, %c0_32] : memref<49x512xf32, #tpu.memory_space<vmem>>, vector<1x512xf32>
    %118 = vector.shape_cast %117 : vector<1x512xf32> to vector<512xf32>
    %119 = vector.shape_cast %118 : vector<512xf32> to vector<1x512xf32>
    %120 = vector.broadcast %119 : vector<1x512xf32> to vector<2x512xf32>
    %121 = arith.mulf %116, %120 : vector<2x512xf32>
    %122 = arith.addf %115, %121 : vector<2x512xf32>
    %c29_i32 = arith.constant 29 : i32
    %123 = tpu.dynamic_rotate %33 by %c29_i32 dim 1 : vector<2x512xf32>, i32 -> vector<2x512xf32>
    %c13 = arith.constant 13 : index
    %c0_33 = arith.constant 0 : index
    %124 = vector.load %arg6[%c13, %c0_33] : memref<49x512xf32, #tpu.memory_space<vmem>>, vector<1x512xf32>
    %125 = vector.shape_cast %124 : vector<1x512xf32> to vector<512xf32>
    %126 = vector.shape_cast %125 : vector<512xf32> to vector<1x512xf32>
    %127 = vector.broadcast %126 : vector<1x512xf32> to vector<2x512xf32>
    %128 = arith.mulf %123, %127 : vector<2x512xf32>
    %129 = arith.addf %122, %128 : vector<2x512xf32>
    %c19_i32 = arith.constant 19 : i32
    %130 = tpu.dynamic_rotate %33 by %c19_i32 dim 1 : vector<2x512xf32>, i32 -> vector<2x512xf32>
    %c14 = arith.constant 14 : index
    %c0_34 = arith.constant 0 : index
    %131 = vector.load %arg6[%c14, %c0_34] : memref<49x512xf32, #tpu.memory_space<vmem>>, vector<1x512xf32>
    %132 = vector.shape_cast %131 : vector<1x512xf32> to vector<512xf32>
    %133 = vector.shape_cast %132 : vector<512xf32> to vector<1x512xf32>
    %134 = vector.broadcast %133 : vector<1x512xf32> to vector<2x512xf32>
    %135 = arith.mulf %130, %134 : vector<2x512xf32>
    %c18_i32 = arith.constant 18 : i32
    %136 = tpu.dynamic_rotate %33 by %c18_i32 dim 1 : vector<2x512xf32>, i32 -> vector<2x512xf32>
    %c15 = arith.constant 15 : index
    %c0_35 = arith.constant 0 : index
    %137 = vector.load %arg6[%c15, %c0_35] : memref<49x512xf32, #tpu.memory_space<vmem>>, vector<1x512xf32>
    %138 = vector.shape_cast %137 : vector<1x512xf32> to vector<512xf32>
    %139 = vector.shape_cast %138 : vector<512xf32> to vector<1x512xf32>
    %140 = vector.broadcast %139 : vector<1x512xf32> to vector<2x512xf32>
    %141 = arith.mulf %136, %140 : vector<2x512xf32>
    %142 = arith.addf %135, %141 : vector<2x512xf32>
    %c17_i32 = arith.constant 17 : i32
    %143 = tpu.dynamic_rotate %33 by %c17_i32 dim 1 : vector<2x512xf32>, i32 -> vector<2x512xf32>
    %c16 = arith.constant 16 : index
    %c0_36 = arith.constant 0 : index
    %144 = vector.load %arg6[%c16, %c0_36] : memref<49x512xf32, #tpu.memory_space<vmem>>, vector<1x512xf32>
    %145 = vector.shape_cast %144 : vector<1x512xf32> to vector<512xf32>
    %146 = vector.shape_cast %145 : vector<512xf32> to vector<1x512xf32>
    %147 = vector.broadcast %146 : vector<1x512xf32> to vector<2x512xf32>
    %148 = arith.mulf %143, %147 : vector<2x512xf32>
    %149 = arith.addf %142, %148 : vector<2x512xf32>
    %c16_i32 = arith.constant 16 : i32
    %150 = tpu.dynamic_rotate %33 by %c16_i32 dim 1 : vector<2x512xf32>, i32 -> vector<2x512xf32>
    %c17 = arith.constant 17 : index
    %c0_37 = arith.constant 0 : index
    %151 = vector.load %arg6[%c17, %c0_37] : memref<49x512xf32, #tpu.memory_space<vmem>>, vector<1x512xf32>
    %152 = vector.shape_cast %151 : vector<1x512xf32> to vector<512xf32>
    %153 = vector.shape_cast %152 : vector<512xf32> to vector<1x512xf32>
    %154 = vector.broadcast %153 : vector<1x512xf32> to vector<2x512xf32>
    %155 = arith.mulf %150, %154 : vector<2x512xf32>
    %156 = arith.addf %149, %155 : vector<2x512xf32>
    %c15_i32 = arith.constant 15 : i32
    %157 = tpu.dynamic_rotate %33 by %c15_i32 dim 1 : vector<2x512xf32>, i32 -> vector<2x512xf32>
    %c18 = arith.constant 18 : index
    %c0_38 = arith.constant 0 : index
    %158 = vector.load %arg6[%c18, %c0_38] : memref<49x512xf32, #tpu.memory_space<vmem>>, vector<1x512xf32>
    %159 = vector.shape_cast %158 : vector<1x512xf32> to vector<512xf32>
    %160 = vector.shape_cast %159 : vector<512xf32> to vector<1x512xf32>
    %161 = vector.broadcast %160 : vector<1x512xf32> to vector<2x512xf32>
    %162 = arith.mulf %157, %161 : vector<2x512xf32>
    %163 = arith.addf %156, %162 : vector<2x512xf32>
    %c14_i32 = arith.constant 14 : i32
    %164 = tpu.dynamic_rotate %33 by %c14_i32 dim 1 : vector<2x512xf32>, i32 -> vector<2x512xf32>
    %c19 = arith.constant 19 : index
    %c0_39 = arith.constant 0 : index
    %165 = vector.load %arg6[%c19, %c0_39] : memref<49x512xf32, #tpu.memory_space<vmem>>, vector<1x512xf32>
    %166 = vector.shape_cast %165 : vector<1x512xf32> to vector<512xf32>
    %167 = vector.shape_cast %166 : vector<512xf32> to vector<1x512xf32>
    %168 = vector.broadcast %167 : vector<1x512xf32> to vector<2x512xf32>
    %169 = arith.mulf %164, %168 : vector<2x512xf32>
    %170 = arith.addf %163, %169 : vector<2x512xf32>
    %c13_i32 = arith.constant 13 : i32
    %171 = tpu.dynamic_rotate %33 by %c13_i32 dim 1 : vector<2x512xf32>, i32 -> vector<2x512xf32>
    %c20 = arith.constant 20 : index
    %c0_40 = arith.constant 0 : index
    %172 = vector.load %arg6[%c20, %c0_40] : memref<49x512xf32, #tpu.memory_space<vmem>>, vector<1x512xf32>
    %173 = vector.shape_cast %172 : vector<1x512xf32> to vector<512xf32>
    %174 = vector.shape_cast %173 : vector<512xf32> to vector<1x512xf32>
    %175 = vector.broadcast %174 : vector<1x512xf32> to vector<2x512xf32>
    %176 = arith.mulf %171, %175 : vector<2x512xf32>
    %177 = arith.addf %170, %176 : vector<2x512xf32>
    %c3_i32 = arith.constant 3 : i32
    %178 = tpu.dynamic_rotate %33 by %c3_i32 dim 1 : vector<2x512xf32>, i32 -> vector<2x512xf32>
    %c21 = arith.constant 21 : index
    %c0_41 = arith.constant 0 : index
    %179 = vector.load %arg6[%c21, %c0_41] : memref<49x512xf32, #tpu.memory_space<vmem>>, vector<1x512xf32>
    %180 = vector.shape_cast %179 : vector<1x512xf32> to vector<512xf32>
    %181 = vector.shape_cast %180 : vector<512xf32> to vector<1x512xf32>
    %182 = vector.broadcast %181 : vector<1x512xf32> to vector<2x512xf32>
    %183 = arith.mulf %178, %182 : vector<2x512xf32>
    %c2_i32 = arith.constant 2 : i32
    %184 = tpu.dynamic_rotate %33 by %c2_i32 dim 1 : vector<2x512xf32>, i32 -> vector<2x512xf32>
    %c22 = arith.constant 22 : index
    %c0_42 = arith.constant 0 : index
    %185 = vector.load %arg6[%c22, %c0_42] : memref<49x512xf32, #tpu.memory_space<vmem>>, vector<1x512xf32>
    %186 = vector.shape_cast %185 : vector<1x512xf32> to vector<512xf32>
    %187 = vector.shape_cast %186 : vector<512xf32> to vector<1x512xf32>
    %188 = vector.broadcast %187 : vector<1x512xf32> to vector<2x512xf32>
    %189 = arith.mulf %184, %188 : vector<2x512xf32>
    %190 = arith.addf %183, %189 : vector<2x512xf32>
    %c1_i32 = arith.constant 1 : i32
    %191 = tpu.dynamic_rotate %33 by %c1_i32 dim 1 : vector<2x512xf32>, i32 -> vector<2x512xf32>
    %c23 = arith.constant 23 : index
    %c0_43 = arith.constant 0 : index
    %192 = vector.load %arg6[%c23, %c0_43] : memref<49x512xf32, #tpu.memory_space<vmem>>, vector<1x512xf32>
    %193 = vector.shape_cast %192 : vector<1x512xf32> to vector<512xf32>
    %194 = vector.shape_cast %193 : vector<512xf32> to vector<1x512xf32>
    %195 = vector.broadcast %194 : vector<1x512xf32> to vector<2x512xf32>
    %196 = arith.mulf %191, %195 : vector<2x512xf32>
    %197 = arith.addf %190, %196 : vector<2x512xf32>
    %c24 = arith.constant 24 : index
    %c0_44 = arith.constant 0 : index
    %198 = vector.load %arg6[%c24, %c0_44] : memref<49x512xf32, #tpu.memory_space<vmem>>, vector<1x512xf32>
    %199 = vector.shape_cast %198 : vector<1x512xf32> to vector<512xf32>
    %200 = vector.shape_cast %199 : vector<512xf32> to vector<1x512xf32>
    %201 = vector.broadcast %200 : vector<1x512xf32> to vector<2x512xf32>
    %202 = arith.mulf %33, %201 : vector<2x512xf32>
    %203 = arith.addf %197, %202 : vector<2x512xf32>
    %c511_i32 = arith.constant 511 : i32
    %204 = tpu.dynamic_rotate %33 by %c511_i32 dim 1 : vector<2x512xf32>, i32 -> vector<2x512xf32>
    %c25 = arith.constant 25 : index
    %c0_45 = arith.constant 0 : index
    %205 = vector.load %arg6[%c25, %c0_45] : memref<49x512xf32, #tpu.memory_space<vmem>>, vector<1x512xf32>
    %206 = vector.shape_cast %205 : vector<1x512xf32> to vector<512xf32>
    %207 = vector.shape_cast %206 : vector<512xf32> to vector<1x512xf32>
    %208 = vector.broadcast %207 : vector<1x512xf32> to vector<2x512xf32>
    %209 = arith.mulf %204, %208 : vector<2x512xf32>
    %210 = arith.addf %203, %209 : vector<2x512xf32>
    %c510_i32 = arith.constant 510 : i32
    %211 = tpu.dynamic_rotate %33 by %c510_i32 dim 1 : vector<2x512xf32>, i32 -> vector<2x512xf32>
    %c26 = arith.constant 26 : index
    %c0_46 = arith.constant 0 : index
    %212 = vector.load %arg6[%c26, %c0_46] : memref<49x512xf32, #tpu.memory_space<vmem>>, vector<1x512xf32>
    %213 = vector.shape_cast %212 : vector<1x512xf32> to vector<512xf32>
    %214 = vector.shape_cast %213 : vector<512xf32> to vector<1x512xf32>
    %215 = vector.broadcast %214 : vector<1x512xf32> to vector<2x512xf32>
    %216 = arith.mulf %211, %215 : vector<2x512xf32>
    %217 = arith.addf %210, %216 : vector<2x512xf32>
    %c509_i32 = arith.constant 509 : i32
    %218 = tpu.dynamic_rotate %33 by %c509_i32 dim 1 : vector<2x512xf32>, i32 -> vector<2x512xf32>
    %c27 = arith.constant 27 : index
    %c0_47 = arith.constant 0 : index
    %219 = vector.load %arg6[%c27, %c0_47] : memref<49x512xf32, #tpu.memory_space<vmem>>, vector<1x512xf32>
    %220 = vector.shape_cast %219 : vector<1x512xf32> to vector<512xf32>
    %221 = vector.shape_cast %220 : vector<512xf32> to vector<1x512xf32>
    %222 = vector.broadcast %221 : vector<1x512xf32> to vector<2x512xf32>
    %223 = arith.mulf %218, %222 : vector<2x512xf32>
    %224 = arith.addf %217, %223 : vector<2x512xf32>
    %c499_i32 = arith.constant 499 : i32
    %225 = tpu.dynamic_rotate %33 by %c499_i32 dim 1 : vector<2x512xf32>, i32 -> vector<2x512xf32>
    %c28 = arith.constant 28 : index
    %c0_48 = arith.constant 0 : index
    %226 = vector.load %arg6[%c28, %c0_48] : memref<49x512xf32, #tpu.memory_space<vmem>>, vector<1x512xf32>
    %227 = vector.shape_cast %226 : vector<1x512xf32> to vector<512xf32>
    %228 = vector.shape_cast %227 : vector<512xf32> to vector<1x512xf32>
    %229 = vector.broadcast %228 : vector<1x512xf32> to vector<2x512xf32>
    %230 = arith.mulf %225, %229 : vector<2x512xf32>
    %c498_i32 = arith.constant 498 : i32
    %231 = tpu.dynamic_rotate %33 by %c498_i32 dim 1 : vector<2x512xf32>, i32 -> vector<2x512xf32>
    %c29 = arith.constant 29 : index
    %c0_49 = arith.constant 0 : index
    %232 = vector.load %arg6[%c29, %c0_49] : memref<49x512xf32, #tpu.memory_space<vmem>>, vector<1x512xf32>
    %233 = vector.shape_cast %232 : vector<1x512xf32> to vector<512xf32>
    %234 = vector.shape_cast %233 : vector<512xf32> to vector<1x512xf32>
    %235 = vector.broadcast %234 : vector<1x512xf32> to vector<2x512xf32>
    %236 = arith.mulf %231, %235 : vector<2x512xf32>
    %237 = arith.addf %230, %236 : vector<2x512xf32>
    %c497_i32 = arith.constant 497 : i32
    %238 = tpu.dynamic_rotate %33 by %c497_i32 dim 1 : vector<2x512xf32>, i32 -> vector<2x512xf32>
    %c30 = arith.constant 30 : index
    %c0_50 = arith.constant 0 : index
    %239 = vector.load %arg6[%c30, %c0_50] : memref<49x512xf32, #tpu.memory_space<vmem>>, vector<1x512xf32>
    %240 = vector.shape_cast %239 : vector<1x512xf32> to vector<512xf32>
    %241 = vector.shape_cast %240 : vector<512xf32> to vector<1x512xf32>
    %242 = vector.broadcast %241 : vector<1x512xf32> to vector<2x512xf32>
    %243 = arith.mulf %238, %242 : vector<2x512xf32>
    %244 = arith.addf %237, %243 : vector<2x512xf32>
    %c496_i32 = arith.constant 496 : i32
    %245 = tpu.dynamic_rotate %33 by %c496_i32 dim 1 : vector<2x512xf32>, i32 -> vector<2x512xf32>
    %c31 = arith.constant 31 : index
    %c0_51 = arith.constant 0 : index
    %246 = vector.load %arg6[%c31, %c0_51] : memref<49x512xf32, #tpu.memory_space<vmem>>, vector<1x512xf32>
    %247 = vector.shape_cast %246 : vector<1x512xf32> to vector<512xf32>
    %248 = vector.shape_cast %247 : vector<512xf32> to vector<1x512xf32>
    %249 = vector.broadcast %248 : vector<1x512xf32> to vector<2x512xf32>
    %250 = arith.mulf %245, %249 : vector<2x512xf32>
    %251 = arith.addf %244, %250 : vector<2x512xf32>
    %c495_i32 = arith.constant 495 : i32
    %252 = tpu.dynamic_rotate %33 by %c495_i32 dim 1 : vector<2x512xf32>, i32 -> vector<2x512xf32>
    %c32 = arith.constant 32 : index
    %c0_52 = arith.constant 0 : index
    %253 = vector.load %arg6[%c32, %c0_52] : memref<49x512xf32, #tpu.memory_space<vmem>>, vector<1x512xf32>
    %254 = vector.shape_cast %253 : vector<1x512xf32> to vector<512xf32>
    %255 = vector.shape_cast %254 : vector<512xf32> to vector<1x512xf32>
    %256 = vector.broadcast %255 : vector<1x512xf32> to vector<2x512xf32>
    %257 = arith.mulf %252, %256 : vector<2x512xf32>
    %258 = arith.addf %251, %257 : vector<2x512xf32>
    %c494_i32 = arith.constant 494 : i32
    %259 = tpu.dynamic_rotate %33 by %c494_i32 dim 1 : vector<2x512xf32>, i32 -> vector<2x512xf32>
    %c33 = arith.constant 33 : index
    %c0_53 = arith.constant 0 : index
    %260 = vector.load %arg6[%c33, %c0_53] : memref<49x512xf32, #tpu.memory_space<vmem>>, vector<1x512xf32>
    %261 = vector.shape_cast %260 : vector<1x512xf32> to vector<512xf32>
    %262 = vector.shape_cast %261 : vector<512xf32> to vector<1x512xf32>
    %263 = vector.broadcast %262 : vector<1x512xf32> to vector<2x512xf32>
    %264 = arith.mulf %259, %263 : vector<2x512xf32>
    %265 = arith.addf %258, %264 : vector<2x512xf32>
    %c493_i32 = arith.constant 493 : i32
    %266 = tpu.dynamic_rotate %33 by %c493_i32 dim 1 : vector<2x512xf32>, i32 -> vector<2x512xf32>
    %c34 = arith.constant 34 : index
    %c0_54 = arith.constant 0 : index
    %267 = vector.load %arg6[%c34, %c0_54] : memref<49x512xf32, #tpu.memory_space<vmem>>, vector<1x512xf32>
    %268 = vector.shape_cast %267 : vector<1x512xf32> to vector<512xf32>
    %269 = vector.shape_cast %268 : vector<512xf32> to vector<1x512xf32>
    %270 = vector.broadcast %269 : vector<1x512xf32> to vector<2x512xf32>
    %271 = arith.mulf %266, %270 : vector<2x512xf32>
    %272 = arith.addf %265, %271 : vector<2x512xf32>
    %c483_i32 = arith.constant 483 : i32
    %273 = tpu.dynamic_rotate %33 by %c483_i32 dim 1 : vector<2x512xf32>, i32 -> vector<2x512xf32>
    %c35 = arith.constant 35 : index
    %c0_55 = arith.constant 0 : index
    %274 = vector.load %arg6[%c35, %c0_55] : memref<49x512xf32, #tpu.memory_space<vmem>>, vector<1x512xf32>
    %275 = vector.shape_cast %274 : vector<1x512xf32> to vector<512xf32>
    %276 = vector.shape_cast %275 : vector<512xf32> to vector<1x512xf32>
    %277 = vector.broadcast %276 : vector<1x512xf32> to vector<2x512xf32>
    %278 = arith.mulf %273, %277 : vector<2x512xf32>
    %c482_i32 = arith.constant 482 : i32
    %279 = tpu.dynamic_rotate %33 by %c482_i32 dim 1 : vector<2x512xf32>, i32 -> vector<2x512xf32>
    %c36 = arith.constant 36 : index
    %c0_56 = arith.constant 0 : index
    %280 = vector.load %arg6[%c36, %c0_56] : memref<49x512xf32, #tpu.memory_space<vmem>>, vector<1x512xf32>
    %281 = vector.shape_cast %280 : vector<1x512xf32> to vector<512xf32>
    %282 = vector.shape_cast %281 : vector<512xf32> to vector<1x512xf32>
    %283 = vector.broadcast %282 : vector<1x512xf32> to vector<2x512xf32>
    %284 = arith.mulf %279, %283 : vector<2x512xf32>
    %285 = arith.addf %278, %284 : vector<2x512xf32>
    %c481_i32 = arith.constant 481 : i32
    %286 = tpu.dynamic_rotate %33 by %c481_i32 dim 1 : vector<2x512xf32>, i32 -> vector<2x512xf32>
    %c37 = arith.constant 37 : index
    %c0_57 = arith.constant 0 : index
    %287 = vector.load %arg6[%c37, %c0_57] : memref<49x512xf32, #tpu.memory_space<vmem>>, vector<1x512xf32>
    %288 = vector.shape_cast %287 : vector<1x512xf32> to vector<512xf32>
    %289 = vector.shape_cast %288 : vector<512xf32> to vector<1x512xf32>
    %290 = vector.broadcast %289 : vector<1x512xf32> to vector<2x512xf32>
    %291 = arith.mulf %286, %290 : vector<2x512xf32>
    %292 = arith.addf %285, %291 : vector<2x512xf32>
    %c480_i32 = arith.constant 480 : i32
    %293 = tpu.dynamic_rotate %33 by %c480_i32 dim 1 : vector<2x512xf32>, i32 -> vector<2x512xf32>
    %c38 = arith.constant 38 : index
    %c0_58 = arith.constant 0 : index
    %294 = vector.load %arg6[%c38, %c0_58] : memref<49x512xf32, #tpu.memory_space<vmem>>, vector<1x512xf32>
    %295 = vector.shape_cast %294 : vector<1x512xf32> to vector<512xf32>
    %296 = vector.shape_cast %295 : vector<512xf32> to vector<1x512xf32>
    %297 = vector.broadcast %296 : vector<1x512xf32> to vector<2x512xf32>
    %298 = arith.mulf %293, %297 : vector<2x512xf32>
    %299 = arith.addf %292, %298 : vector<2x512xf32>
    %c479_i32 = arith.constant 479 : i32
    %300 = tpu.dynamic_rotate %33 by %c479_i32 dim 1 : vector<2x512xf32>, i32 -> vector<2x512xf32>
    %c39 = arith.constant 39 : index
    %c0_59 = arith.constant 0 : index
    %301 = vector.load %arg6[%c39, %c0_59] : memref<49x512xf32, #tpu.memory_space<vmem>>, vector<1x512xf32>
    %302 = vector.shape_cast %301 : vector<1x512xf32> to vector<512xf32>
    %303 = vector.shape_cast %302 : vector<512xf32> to vector<1x512xf32>
    %304 = vector.broadcast %303 : vector<1x512xf32> to vector<2x512xf32>
    %305 = arith.mulf %300, %304 : vector<2x512xf32>
    %306 = arith.addf %299, %305 : vector<2x512xf32>
    %c478_i32 = arith.constant 478 : i32
    %307 = tpu.dynamic_rotate %33 by %c478_i32 dim 1 : vector<2x512xf32>, i32 -> vector<2x512xf32>
    %c40 = arith.constant 40 : index
    %c0_60 = arith.constant 0 : index
    %308 = vector.load %arg6[%c40, %c0_60] : memref<49x512xf32, #tpu.memory_space<vmem>>, vector<1x512xf32>
    %309 = vector.shape_cast %308 : vector<1x512xf32> to vector<512xf32>
    %310 = vector.shape_cast %309 : vector<512xf32> to vector<1x512xf32>
    %311 = vector.broadcast %310 : vector<1x512xf32> to vector<2x512xf32>
    %312 = arith.mulf %307, %311 : vector<2x512xf32>
    %313 = arith.addf %306, %312 : vector<2x512xf32>
    %c477_i32 = arith.constant 477 : i32
    %314 = tpu.dynamic_rotate %33 by %c477_i32 dim 1 : vector<2x512xf32>, i32 -> vector<2x512xf32>
    %c41 = arith.constant 41 : index
    %c0_61 = arith.constant 0 : index
    %315 = vector.load %arg6[%c41, %c0_61] : memref<49x512xf32, #tpu.memory_space<vmem>>, vector<1x512xf32>
    %316 = vector.shape_cast %315 : vector<1x512xf32> to vector<512xf32>
    %317 = vector.shape_cast %316 : vector<512xf32> to vector<1x512xf32>
    %318 = vector.broadcast %317 : vector<1x512xf32> to vector<2x512xf32>
    %319 = arith.mulf %314, %318 : vector<2x512xf32>
    %320 = arith.addf %313, %319 : vector<2x512xf32>
    %c467_i32 = arith.constant 467 : i32
    %321 = tpu.dynamic_rotate %33 by %c467_i32 dim 1 : vector<2x512xf32>, i32 -> vector<2x512xf32>
    %c42 = arith.constant 42 : index
    %c0_62 = arith.constant 0 : index
    %322 = vector.load %arg6[%c42, %c0_62] : memref<49x512xf32, #tpu.memory_space<vmem>>, vector<1x512xf32>
    %323 = vector.shape_cast %322 : vector<1x512xf32> to vector<512xf32>
    %324 = vector.shape_cast %323 : vector<512xf32> to vector<1x512xf32>
    %325 = vector.broadcast %324 : vector<1x512xf32> to vector<2x512xf32>
    %326 = arith.mulf %321, %325 : vector<2x512xf32>
    %c466_i32 = arith.constant 466 : i32
    %327 = tpu.dynamic_rotate %33 by %c466_i32 dim 1 : vector<2x512xf32>, i32 -> vector<2x512xf32>
    %c43 = arith.constant 43 : index
    %c0_63 = arith.constant 0 : index
    %328 = vector.load %arg6[%c43, %c0_63] : memref<49x512xf32, #tpu.memory_space<vmem>>, vector<1x512xf32>
    %329 = vector.shape_cast %328 : vector<1x512xf32> to vector<512xf32>
    %330 = vector.shape_cast %329 : vector<512xf32> to vector<1x512xf32>
    %331 = vector.broadcast %330 : vector<1x512xf32> to vector<2x512xf32>
    %332 = arith.mulf %327, %331 : vector<2x512xf32>
    %333 = arith.addf %326, %332 : vector<2x512xf32>
    %c465_i32 = arith.constant 465 : i32
    %334 = tpu.dynamic_rotate %33 by %c465_i32 dim 1 : vector<2x512xf32>, i32 -> vector<2x512xf32>
    %c44 = arith.constant 44 : index
    %c0_64 = arith.constant 0 : index
    %335 = vector.load %arg6[%c44, %c0_64] : memref<49x512xf32, #tpu.memory_space<vmem>>, vector<1x512xf32>
    %336 = vector.shape_cast %335 : vector<1x512xf32> to vector<512xf32>
    %337 = vector.shape_cast %336 : vector<512xf32> to vector<1x512xf32>
    %338 = vector.broadcast %337 : vector<1x512xf32> to vector<2x512xf32>
    %339 = arith.mulf %334, %338 : vector<2x512xf32>
    %340 = arith.addf %333, %339 : vector<2x512xf32>
    %c464_i32 = arith.constant 464 : i32
    %341 = tpu.dynamic_rotate %33 by %c464_i32 dim 1 : vector<2x512xf32>, i32 -> vector<2x512xf32>
    %c45 = arith.constant 45 : index
    %c0_65 = arith.constant 0 : index
    %342 = vector.load %arg6[%c45, %c0_65] : memref<49x512xf32, #tpu.memory_space<vmem>>, vector<1x512xf32>
    %343 = vector.shape_cast %342 : vector<1x512xf32> to vector<512xf32>
    %344 = vector.shape_cast %343 : vector<512xf32> to vector<1x512xf32>
    %345 = vector.broadcast %344 : vector<1x512xf32> to vector<2x512xf32>
    %346 = arith.mulf %341, %345 : vector<2x512xf32>
    %347 = arith.addf %340, %346 : vector<2x512xf32>
    %c463_i32 = arith.constant 463 : i32
    %348 = tpu.dynamic_rotate %33 by %c463_i32 dim 1 : vector<2x512xf32>, i32 -> vector<2x512xf32>
    %c46 = arith.constant 46 : index
    %c0_66 = arith.constant 0 : index
    %349 = vector.load %arg6[%c46, %c0_66] : memref<49x512xf32, #tpu.memory_space<vmem>>, vector<1x512xf32>
    %350 = vector.shape_cast %349 : vector<1x512xf32> to vector<512xf32>
    %351 = vector.shape_cast %350 : vector<512xf32> to vector<1x512xf32>
    %352 = vector.broadcast %351 : vector<1x512xf32> to vector<2x512xf32>
    %353 = arith.mulf %348, %352 : vector<2x512xf32>
    %354 = arith.addf %347, %353 : vector<2x512xf32>
    %c462_i32 = arith.constant 462 : i32
    %355 = tpu.dynamic_rotate %33 by %c462_i32 dim 1 : vector<2x512xf32>, i32 -> vector<2x512xf32>
    %c47 = arith.constant 47 : index
    %c0_67 = arith.constant 0 : index
    %356 = vector.load %arg6[%c47, %c0_67] : memref<49x512xf32, #tpu.memory_space<vmem>>, vector<1x512xf32>
    %357 = vector.shape_cast %356 : vector<1x512xf32> to vector<512xf32>
    %358 = vector.shape_cast %357 : vector<512xf32> to vector<1x512xf32>
    %359 = vector.broadcast %358 : vector<1x512xf32> to vector<2x512xf32>
    %360 = arith.mulf %355, %359 : vector<2x512xf32>
    %361 = arith.addf %354, %360 : vector<2x512xf32>
    %c461_i32 = arith.constant 461 : i32
    %362 = tpu.dynamic_rotate %33 by %c461_i32 dim 1 : vector<2x512xf32>, i32 -> vector<2x512xf32>
    %c48 = arith.constant 48 : index
    %c0_68 = arith.constant 0 : index
    %363 = vector.load %arg6[%c48, %c0_68] : memref<49x512xf32, #tpu.memory_space<vmem>>, vector<1x512xf32>
    %364 = vector.shape_cast %363 : vector<1x512xf32> to vector<512xf32>
    %365 = vector.shape_cast %364 : vector<512xf32> to vector<1x512xf32>
    %366 = vector.broadcast %365 : vector<1x512xf32> to vector<2x512xf32>
    %367 = arith.mulf %362, %366 : vector<2x512xf32>
    %368 = arith.addf %361, %367 : vector<2x512xf32>
    %369 = arith.addf %81, %129 : vector<2x512xf32>
    %370 = arith.addf %369, %177 : vector<2x512xf32>
    %371 = arith.addf %370, %224 : vector<2x512xf32>
    %372 = arith.addf %371, %272 : vector<2x512xf32>
    %373 = arith.addf %372, %320 : vector<2x512xf32>
    %374 = arith.addf %373, %368 : vector<2x512xf32>
    %375 = vector.extract_strided_slice %374 {offsets = [0, 0], sizes = [2, 256], strides = [1, 1]} : vector<2x512xf32> to vector<2x256xf32>
    %376 = vector.extract_strided_slice %374 {offsets = [0, 256], sizes = [2, 256], strides = [1, 1]} : vector<2x512xf32> to vector<2x256xf32>
    %377 = arith.addf %375, %376 : vector<2x256xf32>
    %c0_69 = arith.constant 0 : index
    %378 = memref.load %arg7[%c0_69] : memref<2xf32, #tpu.memory_space<smem>>
    %379 = vector.broadcast %378 : f32 to vector<2x256xf32>
    %380 = arith.mulf %377, %379 : vector<2x256xf32>
    %c1_70 = arith.constant 1 : index
    %381 = memref.load %arg7[%c1_70] : memref<2xf32, #tpu.memory_space<smem>>
    %382 = vector.broadcast %381 : f32 to vector<2x256xf32>
    %383 = arith.addf %380, %382 : vector<2x256xf32>
    %384 = arith.negf %383 : vector<2x256xf32>
    %385 = math.exp %384 : vector<2x256xf32>
    %cst_71 = arith.constant 1.000000e+00 : f32
    %386 = vector.broadcast %cst_71 : f32 to vector<2x256xf32>
    %387 = arith.addf %386, %385 : vector<2x256xf32>
    %388 = arith.divf %386, %387 : vector<2x256xf32>
    %389 = vector.shape_cast %388 : vector<2x256xf32> to vector<2x1x256xf32>
    %390 = vector.broadcast %26 : vector<2x32x1xf32> to vector<2x32x256xf32>
    %391 = arith.mulf %0, %390 : vector<2x32x256xf32>
    %392 = vector.broadcast %389 : vector<2x1x256xf32> to vector<2x32x256xf32>
    %393 = arith.mulf %391, %392 : vector<2x32x256xf32>
    %c0_72 = arith.constant 0 : index
    %c0_73 = arith.constant 0 : index
    %c0_74 = arith.constant 0 : index
    %394 = vector.load %arg8[%c0_72, %c0_73, %c0_74] : memref<2x32x256xf32, #tpu.memory_space<vmem>>, vector<2x32x256xf32>
    tpu.vector_store %arg8[%c0_72, %c0_73, %c0_74], %393 {strides = array<i32>} : memref<2x32x256xf32, #tpu.memory_space<vmem>>, vector<2x32x256xf32>,
    return
  }
  func.func @transform_0(%arg0: i32) -> (i32, i32, i32) {
    %c0_i32 = arith.constant 0 : i32
    %c0_i32_0 = arith.constant 0 : i32
    %c0_i32_1 = arith.constant 0 : i32
    return %arg0, %c0_i32, %c0_i32_0 : i32, i32, i32
  }
  func.func @transform_1(%arg0: i32) -> (i32, i32) {
    %c0_i32 = arith.constant 0 : i32
    %c0_i32_0 = arith.constant 0 : i32
    %c0_i32_1 = arith.constant 0 : i32
    return %c0_i32, %c0_i32_0 : i32, i32
  }
  func.func @transform_2(%arg0: i32) -> (i32, i32) {
    %c0_i32 = arith.constant 0 : i32
    %c0_i32_0 = arith.constant 0 : i32
    %c0_i32_1 = arith.constant 0 : i32
    return %c0_i32, %c0_i32_0 : i32, i32
  }
  func.func @transform_3(%arg0: i32) -> (i32, i32) {
    %c0_i32 = arith.constant 0 : i32
    %c0_i32_0 = arith.constant 0 : i32
    %c0_i32_1 = arith.constant 0 : i32
    return %c0_i32, %c0_i32_0 : i32, i32
  }
  func.func @transform_4(%arg0: i32) -> (i32, i32) {
    %c0_i32 = arith.constant 0 : i32
    %c0_i32_0 = arith.constant 0 : i32
    %c0_i32_1 = arith.constant 0 : i32
    return %c0_i32, %c0_i32_0 : i32, i32
  }
  func.func @transform_5(%arg0: i32) -> (i32, i32) {
    %c0_i32 = arith.constant 0 : i32
    %c0_i32_0 = arith.constant 0 : i32
    %c0_i32_1 = arith.constant 0 : i32
    return %c0_i32, %c0_i32_0 : i32, i32
  }
  func.func @transform_6(%arg0: i32) -> i32 {
    %c0_i32 = arith.constant 0 : i32
    %c0_i32_0 = arith.constant 0 : i32
    return %c0_i32 : i32
  }
  func.func @transform_7(%arg0: i32) -> (i32, i32, i32) {
    %c0_i32 = arith.constant 0 : i32
    %c0_i32_0 = arith.constant 0 : i32
    %c0_i32_1 = arith.constant 0 : i32
    return %arg0, %c0_i32, %c0_i32_0 : i32, i32, i32
  }
}

</mosaic_0001>

<llo_original>
// kernel: tpu_custom_call.1
$region0: #{tpu_custom_call.1}
  #allocation0 [shape = 'u32[]', space=smem, size = 0x4, offset = 0x4, fixed_abs, tag = 'smem constant byte address 0x4 - core index']
  #allocation1 [shape = 'u32[72,128]{1,0:T(1,128)}', space=vmem, size = 0x9000, scoped, tag = 'internal scratch']
  %s0 = inlined_call_operand.hbm [shape: f32[2,32,256], index: 0, kind: input, shape index: {}]
  %s1 = inlined_call_operand.vmem [shape: f32[32,2], index: 1, kind: input, shape index: {}]
  %s2 = inlined_call_operand.vmem [shape: f32[1,2], index: 2, kind: input, shape index: {}]
  %s3 = inlined_call_operand.vmem [shape: f32[2,32], index: 3, kind: input, shape index: {}]
  %s4 = inlined_call_operand.vmem [shape: f32[1,32], index: 4, kind: input, shape index: {}]
  %s5 = inlined_call_operand.hbm [shape: f32[49,512], index: 5, kind: input, shape index: {}]
  %s6 = inlined_call_operand.vmem [shape: f32[2], index: 6, kind: input, shape index: {}]
  %s7 = inlined_call_operand.hbm [shape: f32[2,32,256], index: 7, kind: output, shape index: {}]
  %s8 = sld [smem:[#allocation0]]
  $region50: #{tpu_custom_call.1} parent=0
    _
  %s10 = ssub.s32 1, %s8
  %s11 = scalar_select 0, %s10, %s8
  $region1: #{tpu_custom_call.1} parent=0
    #allocation2 [shape = 'u8[65536]{0}', space=vmem, size = 0x10000, scoped, tag = 'input window, operand 0, single buffered']
    #allocation3 [shape = 's32[1]{0}', space=sflag, size = 0x4, scoped, tag = 'scoped memory for tpu_custom_call.1']
    #allocation4 [shape = 's32[1]{0}', space=sflag, size = 0x4, scoped, tag = 'scoped memory for tpu_custom_call.1']
    #allocation5 [shape = 's32[1]{0}', space=sflag, size = 0x4, scoped, tag = 'scoped memory for tpu_custom_call.1']
    #allocation6 [shape = 'u8[114688]{0}', space=vmem, size = 0x1c000, scoped, tag = 'input window, operand 5, single buffered']
    #allocation7 [shape = 's32[1]{0}', space=sflag, size = 0x4, scoped, tag = 'scoped memory for tpu_custom_call.1']
    #allocation8 [shape = 'u8[512]{0}', space=smem, size = 0x200, scoped, tag = 'input window, operand 6, single buffered']
    #allocation9 [shape = 'u8[65536]{0}', space=vmem, size = 0x10000, scoped, tag = 'output window, operand 0, single buffered']
    %12 = vsyncpa [#allocation3], 0
    %13 = vsyncpa [#allocation7], 0
    %14 = vsyncpa [#allocation5], 0
    %15 = vsyncpa [#allocation4], 0
    // Predicated region
    $region2: #{tpu_custom_call.1} parent=1 // pred_check
      _
    $region3: #{tpu_custom_call.1} parent=1 // pred_check_branch
      %17 = sbr.rel (0) target = $region5
    $region4: #{tpu_custom_call.1} parent=1 // pred_region
      %19 = vsyncadd [#allocation3], 0
      %s20 = sshll.u32 %s0, 4
      %s21 = int_to_ptr.hbm [resolvable:$true] %s20
      %s22 = sshll.u32 [#allocation2], 4
      %s23 = int_to_ptr.vmem [resolvable:$true] %s22
      %28 = dma.hbm_to_vmem [thread:$0]  %s21, 2048, %s23, [#allocation3], 256, 256, 16
    $region5: #{tpu_custom_call.1} parent=1 // pred_fallthru
      _
    // Predicated region
    $region6: #{tpu_custom_call.1} parent=1 // pred_check
      _
    $region7: #{tpu_custom_call.1} parent=1 // pred_check_branch
      %30 = sbr.rel (0) target = $region9
    $region8: #{tpu_custom_call.1} parent=1 // pred_region
      _
    $region9: #{tpu_custom_call.1} parent=1 // pred_fallthru
      _
    // Predicated region
    $region10: #{tpu_custom_call.1} parent=1 // pred_check
      _
    $region11: #{tpu_custom_call.1} parent=1 // pred_check_branch
      %32 = sbr.rel (0) target = $region13
    $region12: #{tpu_custom_call.1} parent=1 // pred_region
      _
    $region13: #{tpu_custom_call.1} parent=1 // pred_fallthru
      _
    // Predicated region
    $region14: #{tpu_custom_call.1} parent=1 // pred_check
      _
    $region15: #{tpu_custom_call.1} parent=1 // pred_check_branch
      %34 = sbr.rel (0) target = $region17
    $region16: #{tpu_custom_call.1} parent=1 // pred_region
      _
    $region17: #{tpu_custom_call.1} parent=1 // pred_fallthru
      _
    // Predicated region
    $region18: #{tpu_custom_call.1} parent=1 // pred_check
      _
    $region19: #{tpu_custom_call.1} parent=1 // pred_check_branch
      %36 = sbr.rel (0) target = $region21
    $region20: #{tpu_custom_call.1} parent=1 // pred_region
      _
    $region21: #{tpu_custom_call.1} parent=1 // pred_fallthru
      _
    // Predicated region
    $region22: #{tpu_custom_call.1} parent=1 // pred_check
      _
    $region23: #{tpu_custom_call.1} parent=1 // pred_check_branch
      %38 = sbr.rel (0) target = $region25
    $region24: #{tpu_custom_call.1} parent=1 // pred_region
      %40 = vsyncadd [#allocation7], 0
      %s41 = sshll.u32 %s5, 4
      %s42 = int_to_ptr.hbm [resolvable:$true] %s41
      %s43 = sshll.u32 [#allocation6], 4
      %s44 = int_to_ptr.vmem [resolvable:$true] %s43
      %49 = dma.hbm_to_vmem [thread:$0]  %s42, 3584, %s44, [#allocation7], 512, 512, 32
    $region25: #{tpu_custom_call.1} parent=1 // pred_fallthru
      _
    // Predicated region
    $region26: #{tpu_custom_call.1} parent=1 // pred_check
      _
    $region27: #{tpu_custom_call.1} parent=1 // pred_check_branch
      %51 = sbr.rel (0) target = $region29
    $region28: #{tpu_custom_call.1} parent=1 // pred_region
      %53 = vsyncadd [#allocation5], 0
      %s55 = sshll.u32 %s6, 4
      %s56 = int_to_ptr.vmem [resolvable:$true] %s55
      %58 = dma.vmem_to_smem %s56, 16, [#allocation8], [#allocation5]
    $region29: #{tpu_custom_call.1} parent=1 // pred_fallthru
      _
    // Predicated region
    $region30: #{tpu_custom_call.1} parent=1 // pred_check
      _
    $region31: #{tpu_custom_call.1} parent=1 // pred_check_branch
      %60 = sbr.rel (0) target = $region33
    $region32: #{tpu_custom_call.1} parent=1 // pred_region
      %62 = dma.done [#allocation3], 2048
    $region33: #{tpu_custom_call.1} parent=1 // pred_fallthru
      _
    // Predicated region
    $region34: #{tpu_custom_call.1} parent=1 // pred_check
      _
    $region35: #{tpu_custom_call.1} parent=1 // pred_check_branch
      %64 = sbr.rel (0) target = $region37
    $region36: #{tpu_custom_call.1} parent=1 // pred_region
      %66 = dma.done [#allocation7], 3584
    $region37: #{tpu_custom_call.1} parent=1 // pred_fallthru
      _
    // Predicated region
    $region38: #{tpu_custom_call.1} parent=1 // pred_check
      _
    $region39: #{tpu_custom_call.1} parent=1 // pred_check_branch
      %68 = sbr.rel (0) target = $region41
    $region40: #{tpu_custom_call.1} parent=1 // pred_region
      %70 = dma.done [#allocation5], 16
    $region41: #{tpu_custom_call.1} parent=1 // pred_fallthru
      _
    %71 = sfence
    %v72 = vld [vmem:[#allocation2] sm:$0xff]
    %v73 = vld [vmem:[#allocation2 + $0x8] sm:$0xff]
    %v74 = vld [vmem:[#allocation2 + $0x10] sm:$0xff]
    %v75 = vld [vmem:[#allocation2 + $0x18] sm:$0xff]
    %v76 = vld [vmem:[#allocation2 + $0x20] sm:$0xff]
    %v77 = vld [vmem:[#allocation2 + $0x28] sm:$0xff]
    %v78 = vld [vmem:[#allocation2 + $0x30] sm:$0xff]
    %v79 = vld [vmem:[#allocation2 + $0x38] sm:$0xff]
    %v80 = vld [vmem:[#allocation2 + $0x40] sm:$0xff]
    %v81 = vld [vmem:[#allocation2 + $0x48] sm:$0xff]
    %v82 = vld [vmem:[#allocation2 + $0x50] sm:$0xff]
    %v83 = vld [vmem:[#allocation2 + $0x58] sm:$0xff]
    %v84 = vld [vmem:[#allocation2 + $0x60] sm:$0xff]
    %v85 = vld [vmem:[#allocation2 + $0x68] sm:$0xff]
    %v86 = vld [vmem:[#allocation2 + $0x70] sm:$0xff]
    %v87 = vld [vmem:[#allocation2 + $0x78] sm:$0xff]
    %v88 = vadd.f32 %v72, %v73
    %89 = vadd.xlane.f32.xlu0 %v88
    %v90 = vpop.xlane.xlu0 %89
    %v91 = vadd.f32 %v74, %v75
    %92 = vadd.xlane.f32.xlu0 %v91
    %v93 = vpop.xlane.xlu0 %92
    %v94 = vadd.f32 %v76, %v77
    %95 = vadd.xlane.f32.xlu0 %v94
    %v96 = vpop.xlane.xlu0 %95
    %v97 = vadd.f32 %v78, %v79
    %98 = vadd.xlane.f32.xlu0 %v97
    %v99 = vpop.xlane.xlu0 %98
    %v100 = vadd.f32 %v80, %v81
    %101 = vadd.xlane.f32.xlu0 %v100
    %v102 = vpop.xlane.xlu0 %101
    %v103 = vadd.f32 %v82, %v83
    %104 = vadd.xlane.f32.xlu0 %v103
    %v105 = vpop.xlane.xlu0 %104
    %v106 = vadd.f32 %v84, %v85
    %107 = vadd.xlane.f32.xlu0 %v106
    %v108 = vpop.xlane.xlu0 %107
    %v109 = vadd.f32 %v86, %v87
    %110 = vadd.xlane.f32.xlu0 %v109
    %v111 = vpop.xlane.xlu0 %110
    %v112 = vmul.f32 %v90, 0.00390625
    %v113 = vmul.f32 %v93, 0.00390625
    %v114 = vmul.f32 %v96, 0.00390625
    %v115 = vmul.f32 %v99, 0.00390625
    %v116 = vmul.f32 %v102, 0.00390625
    %v117 = vmul.f32 %v105, 0.00390625
    %v118 = vmul.f32 %v108, 0.00390625
    %v119 = vmul.f32 %v111, 0.00390625
    %v120 = vmax.f32 %v72, %v73
    %121 = vmax.xlane.f32.xlu0 %v120
    %v122 = vpop.xlane.xlu0 %121
    %v123 = vmax.f32 %v74, %v75
    %124 = vmax.xlane.f32.xlu0 %v123
    %v125 = vpop.xlane.xlu0 %124
    %v126 = vmax.f32 %v76, %v77
    %127 = vmax.xlane.f32.xlu0 %v126
    %v128 = vpop.xlane.xlu0 %127
    %v129 = vmax.f32 %v78, %v79
    %130 = vmax.xlane.f32.xlu0 %v129
    %v131 = vpop.xlane.xlu0 %130
    %v132 = vmax.f32 %v80, %v81
    %133 = vmax.xlane.f32.xlu0 %v132
    %v134 = vpop.xlane.xlu0 %133
    %v135 = vmax.f32 %v82, %v83
    %136 = vmax.xlane.f32.xlu0 %v135
    %v137 = vpop.xlane.xlu0 %136
    %v138 = vmax.f32 %v84, %v85
    %139 = vmax.xlane.f32.xlu0 %v138
    %v140 = vpop.xlane.xlu0 %139
    %v141 = vmax.f32 %v86, %v87
    %142 = vmax.xlane.f32.xlu0 %v141
    %v143 = vpop.xlane.xlu0 %142
    %v152 = vlaneseq
    %v153 = vand.u32 %v152, 127
    %v154 = vperm.slane %v112, %v153
    %v155 = vadd.s32 %v153, 4294967288
    %v156 = vperm.slane %v113, %v155
    %vm157 = vcmask 130112
    %v158 = vsel %vm157, %v156, %v154
    %v159 = vadd.s32 %v153, 4294967280
    %v160 = vperm.slane %v114, %v159
    %vm161 = vcmask 195712
    %v162 = vsel %vm161, %v160, %v158
    %v163 = vadd.s32 %v153, 4294967272
    %v164 = vperm.slane %v115, %v163
    %vm165 = vcmask 261312
    %v166 = vsel %vm165, %v164, %v162
    %v167 = vperm.slane %v116, %v153
    %v168 = vperm.slane %v117, %v155
    %v169 = vsel %vm157, %v168, %v167
    %v170 = vperm.slane %v118, %v159
    %v171 = vsel %vm161, %v170, %v169
    %v172 = vperm.slane %v119, %v163
    %v173 = vsel %vm165, %v172, %v171
    %vm174 = vcmask 1041409
    %v175 = vsel %vm174, %v173, %v166
    %v185 = vperm.slane %v122, %v153
    %v186 = vperm.slane %v125, %v155
    %v187 = vsel %vm157, %v186, %v185
    %v188 = vperm.slane %v128, %v159
    %v189 = vsel %vm161, %v188, %v187
    %v190 = vperm.slane %v131, %v163
    %v191 = vsel %vm165, %v190, %v189
    %v192 = vperm.slane %v134, %v153
    %v193 = vperm.slane %v137, %v155
    %v194 = vsel %vm157, %v193, %v192
    %v195 = vperm.slane %v140, %v159
    %v196 = vsel %vm161, %v195, %v194
    %v197 = vperm.slane %v143, %v163
    %v198 = vsel %vm165, %v197, %v196
    %vm199 = vcmask 1043459
    %v200 = vsel %vm199, %v198, %v191
    %vm202 = vcmask 1041408
    %v203 = vsel %vm202, %v175, %v200
    %v204 = vld [vmem:[%s1] sm:$0xff]
    %v205 = vld [vmem:[%s1 + $0x8] sm:$0xff]
    %v206 = vld [vmem:[%s1 + $0x10] sm:$0xff]
    %v207 = vld [vmem:[%s1 + $0x18] sm:$0xff]
    %v208 = vld [vmem:[%s2] sm:$0x1]
    %v210 = vperm.slane %v208, 0
    %vm212 = vcmask 261120
    %v214 = vsel %vm212, %v203, 0
    %216 = vmatpush.msra.mxu0 0.0
    %217 = vmatpush.msra.mxu0 0.0
    %218 = vmatpush.msra.mxu0 0.0
    %219 = vmatpush.msra.mxu0 0.0
    %220 = vmatpush.msra.mxu0 0.0
    %221 = vmatpush.msra.mxu0 0.0
    %222 = vmatpush.msra.mxu0 0.0
    %223 = vmatpush.msra.mxu0 0.0
    %224 = vmatpush.msra.mxu0 0.0
    %225 = vmatpush.msra.mxu0 0.0
    %226 = vmatpush.msra.mxu0 0.0
    %227 = vmatpush.msra.mxu0 0.0
    %228 = vmatpush.msra.mxu0 %v207
    %229 = vmatpush.msra.mxu0 %v206
    %230 = vmatpush.msra.mxu0 %v205
    %231 = vmatpush.msra.mxu0 %v204
    %232 = vmatmul.f32.gmra.mxu0 %v214
    %v233 = vpop.f32.mrf.mxu0
    %v234 = vadd.f32 %v210, %v233
    %235 = vdwg.mxu0
    %v236 = vmax.f32 %v234, 0.0
    %v237 = vld [vmem:[%s3] sm:$0x3]
    %v238 = vld [vmem:[%s4] sm:$0x1]
    %v240 = vperm.slane %v238, 0
    %vm242 = vcmask 15360
    %v244 = vsel %vm242, %v236, 0
    %v247 = vsel %vm202, %v237, 0
    %249 = vmatpush.msra.mxu0 0.0
    %250 = vmatpush.msra.mxu0 0.0
    %251 = vmatpush.msra.mxu0 0.0
    %252 = vmatpush.msra.mxu0 0.0
    %253 = vmatpush.msra.mxu0 0.0
    %254 = vmatpush.msra.mxu0 0.0
    %255 = vmatpush.msra.mxu0 0.0
    %256 = vmatpush.msra.mxu0 0.0
    %257 = vmatpush.msra.mxu0 0.0
    %258 = vmatpush.msra.mxu0 0.0
    %259 = vmatpush.msra.mxu0 0.0
    %260 = vmatpush.msra.mxu0 0.0
    %261 = vmatpush.msra.mxu0 0.0
    %262 = vmatpush.msra.mxu0 0.0
    %263 = vmatpush.msra.mxu0 0.0
    %264 = vmatpush.msra.mxu0 %v247
    %265 = vmatmul.f32.gmra.mxu0 %v244
    %v266 = vpop.f32.mrf.mxu0
    %v267 = vadd.f32 %v240, %v266
    %268 = vdwg.mxu0
    %v270 = vrot.slane %v267, 2
    %v272 = vadd.f32 %v267, %v270
    %v273 = vxor.u32 %v272, 2147483648
    %v274 = vmul.f32 %v273, 1.442695
    %v275 = vpow.pop %v274
    %v276 = vadd.f32 %v275, 1.0
    %v277 = vrcp.pop %v276
    %v278 = vmul.f32 %v276, %v277
    %v279 = vsub.f32 1.0, %v278
    %v280 = vmul.f32 %v277, %v279
    %v281 = vadd.f32 %v277, %v280
    %vm282 = vweird.f32 %v276
    %vm283 = vweird.f32 %v277
    %vm284 = vmor %vm282, %vm283
    %v285 = vsel %vm284, %v277, %v281
    %v286 = vand.u32 2147483647, %v276
    %vm287 = vcmp.eq.f32.partialorder %v286, 8.507059e+37
    %v288 = vand.u32 %v276, 2147483648
    %v289 = vor.u32 1.1754944e-38, %v288
    %v290 = vsel %vm287, %v289, %v285
    %v291 = vmul.f32 1.0, %v290
    %v292 = vperm.slane %v291, 0
    %v293 = vlaneseq
    %v294 = vshrl.u32 %v293, 7
    %296 = vset.pattern.permute.xlu0 %v294
    %297 = vperm.xlu0 %296, %v292
    %v298 = vpop.permute.xlu0 %297
    %v299 = vlaneseq
    %v300 = vshrl.u32 %v299, 7
    %v301 = vadd.s32 %v300, 8
    %302 = vset.pattern.permute.xlu0 %v301
    %303 = vperm.xlu0 %302, %v292
    %v304 = vpop.permute.xlu0 %303
    %v305 = vlaneseq
    %v306 = vshrl.u32 %v305, 7
    %v307 = vadd.s32 %v306, 16
    %308 = vset.pattern.permute.xlu0 %v307
    %309 = vperm.xlu0 %308, %v292
    %v310 = vpop.permute.xlu0 %309
    %v311 = vlaneseq
    %v312 = vshrl.u32 %v311, 7
    %v313 = vadd.s32 %v312, 24
    %314 = vset.pattern.permute.xlu0 %v313
    %315 = vperm.xlu0 %314, %v292
    %v316 = vpop.permute.xlu0 %315
    %v317 = vperm.slane %v291, 1
    %v318 = vlaneseq
    %v319 = vshrl.u32 %v318, 7
    %321 = vset.pattern.permute.xlu0 %v319
    %322 = vperm.xlu0 %321, %v317
    %v323 = vpop.permute.xlu0 %322
    %v324 = vlaneseq
    %v325 = vshrl.u32 %v324, 7
    %v326 = vadd.s32 %v325, 8
    %327 = vset.pattern.permute.xlu0 %v326
    %328 = vperm.xlu0 %327, %v317
    %v329 = vpop.permute.xlu0 %328
    %v330 = vlaneseq
    %v331 = vshrl.u32 %v330, 7
    %v332 = vadd.s32 %v331, 16
    %333 = vset.pattern.permute.xlu0 %v332
    %334 = vperm.xlu0 %333, %v317
    %v335 = vpop.permute.xlu0 %334
    %v336 = vlaneseq
    %v337 = vshrl.u32 %v336, 7
    %v338 = vadd.s32 %v337, 24
    %339 = vset.pattern.permute.xlu0 %v338
    %340 = vperm.xlu0 %339, %v317
    %v341 = vpop.permute.xlu0 %340
    %v342 = vmul.f32 %v72, %v298
    %v343 = vmul.f32 %v73, %v298
    %v344 = vmul.f32 %v74, %v304
    %v345 = vmul.f32 %v75, %v304
    %v346 = vmul.f32 %v76, %v310
    %v347 = vmul.f32 %v77, %v310
    %v348 = vmul.f32 %v78, %v316
    %v349 = vmul.f32 %v79, %v316
    %v350 = vmul.f32 %v80, %v323
    %v351 = vmul.f32 %v81, %v323
    %v352 = vmul.f32 %v82, %v329
    %v353 = vmul.f32 %v83, %v329
    %v354 = vmul.f32 %v84, %v335
    %v355 = vmul.f32 %v85, %v335
    %v356 = vmul.f32 %v86, %v341
    %v357 = vmul.f32 %v87, %v341
    %v358 = vmax.f32 %v342, %v344
    %v359 = vmax.f32 %v358, %v346
    %v360 = vmax.f32 %v359, %v348
    %v361 = vrot.slane %v360, 4
    %v362 = vmax.f32 %v360, %v361
    %v363 = vrot.slane %v362, 2
    %v364 = vmax.f32 %v362, %v363
    %v365 = vrot.slane %v364, 1
    %v366 = vmax.f32 %v364, %v365
    %v367 = vmax.f32 %v343, %v345
    %v368 = vmax.f32 %v367, %v347
    %v369 = vmax.f32 %v368, %v349
    %v370 = vrot.slane %v369, 4
    %v371 = vmax.f32 %v369, %v370
    %v372 = vrot.slane %v371, 2
    %v373 = vmax.f32 %v371, %v372
    %v374 = vrot.slane %v373, 1
    %v375 = vmax.f32 %v373, %v374
    %v376 = vmax.f32 %v350, %v352
    %v377 = vmax.f32 %v376, %v354
    %v378 = vmax.f32 %v377, %v356
    %v379 = vrot.slane %v378, 4
    %v380 = vmax.f32 %v378, %v379
    %v381 = vrot.slane %v380, 2
    %v382 = vmax.f32 %v380, %v381
    %v383 = vrot.slane %v382, 1
    %v384 = vmax.f32 %v382, %v383
    %v385 = vmax.f32 %v351, %v353
    %v386 = vmax.f32 %v385, %v355
    %v387 = vmax.f32 %v386, %v357
    %v388 = vrot.slane %v387, 4
    %v389 = vmax.f32 %v387, %v388
    %v390 = vrot.slane %v389, 2
    %v391 = vmax.f32 %v389, %v390
    %v392 = vrot.slane %v391, 1
    %v393 = vmax.f32 %v391, %v392
    %v394 = vadd.f32 %v342, %v344
    %v395 = vadd.f32 %v394, %v346
    %v396 = vadd.f32 %v395, %v348
    %v397 = vrot.slane %v396, 4
    %v398 = vadd.f32 %v396, %v397
    %v399 = vrot.slane %v398, 2
    %v400 = vadd.f32 %v398, %v399
    %v401 = vrot.slane %v400, 1
    %v402 = vadd.f32 %v400, %v401
    %v403 = vadd.f32 %v343, %v345
    %v404 = vadd.f32 %v403, %v347
    %v405 = vadd.f32 %v404, %v349
    %v406 = vrot.slane %v405, 4
    %v407 = vadd.f32 %v405, %v406
    %v408 = vrot.slane %v407, 2
    %v409 = vadd.f32 %v407, %v408
    %v410 = vrot.slane %v409, 1
    %v411 = vadd.f32 %v409, %v410
    %v412 = vadd.f32 %v350, %v352
    %v413 = vadd.f32 %v412, %v354
    %v414 = vadd.f32 %v413, %v356
    %v415 = vrot.slane %v414, 4
    %v416 = vadd.f32 %v414, %v415
    %v417 = vrot.slane %v416, 2
    %v418 = vadd.f32 %v416, %v417
    %v419 = vrot.slane %v418, 1
    %v420 = vadd.f32 %v418, %v419
    %v421 = vadd.f32 %v351, %v353
    %v422 = vadd.f32 %v421, %v355
    %v423 = vadd.f32 %v422, %v357
    %v424 = vrot.slane %v423, 4
    %v425 = vadd.f32 %v423, %v424
    %v426 = vrot.slane %v425, 2
    %v427 = vadd.f32 %v425, %v426
    %v428 = vrot.slane %v427, 1
    %v429 = vadd.f32 %v427, %v428
    %v430 = vmul.f32 %v402, 0.03125
    %v431 = vmul.f32 %v411, 0.03125
    %v432 = vmul.f32 %v420, 0.03125
    %v433 = vmul.f32 %v429, 0.03125
    %v438 = vsel %vm174, %v384, %v366
    %v439 = vsel %vm174, %v393, %v375
    %v446 = vsel %vm174, %v432, %v430
    %v447 = vsel %vm174, %v433, %v431
    %450 = vrot.lane.b32.xlu0 %v438, 51
    %v451 = vpop.permute.xlu0 %450
    %452 = vrot.lane.b32.xlu0 %v439, 51
    %v453 = vpop.permute.xlu0 %452
    %454 = vrot.lane.b32.xlu0 %v446, 51
    %v455 = vpop.permute.xlu0 %454
    %456 = vrot.lane.b32.xlu0 %v447, 51
    %v457 = vpop.permute.xlu0 %456
    %vm458 = vcmp.lt.s32.totalorder %v153, 51
    %v459 = vsel %vm458, %v455, %v457
    %v460 = vsel %vm458, %v453, %v455
    %v461 = vsel %vm458, %v451, %v453
    %v462 = vsel %vm458, %v457, %v451
    %v463 = vld [vmem:[#allocation6] ss:$8 sm:$0xf]
    %v465 = vperm.slane %v463, 0
    %v466 = vperm.slane %v463, 1
    %v467 = vperm.slane %v463, 2
    %v468 = vperm.slane %v463, 3
    %v473 = vmul.f32 %v462, %v465
    %v474 = vmul.f32 %v461, %v466
    %v475 = vmul.f32 %v460, %v467
    %v476 = vmul.f32 %v459, %v468
    %477 = vrot.lane.b32.xlu0 %v438, 50
    %v478 = vpop.permute.xlu0 %477
    %479 = vrot.lane.b32.xlu0 %v439, 50
    %v480 = vpop.permute.xlu0 %479
    %481 = vrot.lane.b32.xlu0 %v446, 50
    %v482 = vpop.permute.xlu0 %481
    %483 = vrot.lane.b32.xlu0 %v447, 50
    %v484 = vpop.permute.xlu0 %483
    %vm485 = vcmp.lt.s32.totalorder %v153, 50
    %v486 = vsel %vm485, %v482, %v484
    %v487 = vsel %vm485, %v480, %v482
    %v488 = vsel %vm485, %v478, %v480
    %v489 = vsel %vm485, %v484, %v478
    %s490 = scalar_lea.vmem [#allocation6], 1
    %v491 = vld [vmem:[%s490] ss:$8 sm:$0xf]
    %v493 = vperm.slane %v491, 0
    %v494 = vperm.slane %v491, 1
    %v495 = vperm.slane %v491, 2
    %v496 = vperm.slane %v491, 3
    %v501 = vmul.f32 %v489, %v493
    %v502 = vmul.f32 %v488, %v494
    %v503 = vmul.f32 %v487, %v495
    %v504 = vmul.f32 %v486, %v496
    %v505 = vadd.f32 %v473, %v501
    %v506 = vadd.f32 %v474, %v502
    %v507 = vadd.f32 %v475, %v503
    %v508 = vadd.f32 %v476, %v504
    %509 = vrot.lane.b32.xlu0 %v438, 49
    %v510 = vpop.permute.xlu0 %509
    %511 = vrot.lane.b32.xlu0 %v439, 49
    %v512 = vpop.permute.xlu0 %511
    %513 = vrot.lane.b32.xlu0 %v446, 49
    %v514 = vpop.permute.xlu0 %513
    %515 = vrot.lane.b32.xlu0 %v447, 49
    %v516 = vpop.permute.xlu0 %515
    %vm517 = vcmp.lt.s32.totalorder %v153, 49
    %v518 = vsel %vm517, %v514, %v516
    %v519 = vsel %vm517, %v512, %v514
    %v520 = vsel %vm517, %v510, %v512
    %v521 = vsel %vm517, %v516, %v510
    %s522 = scalar_lea.vmem [#allocation6], 2
    %v523 = vld [vmem:[%s522] ss:$8 sm:$0xf]
    %v525 = vperm.slane %v523, 0
    %v526 = vperm.slane %v523, 1
    %v527 = vperm.slane %v523, 2
    %v528 = vperm.slane %v523, 3
    %v533 = vmul.f32 %v521, %v525
    %v534 = vmul.f32 %v520, %v526
    %v535 = vmul.f32 %v519, %v527
    %v536 = vmul.f32 %v518, %v528
    %v537 = vadd.f32 %v505, %v533
    %v538 = vadd.f32 %v506, %v534
    %v539 = vadd.f32 %v507, %v535
    %v540 = vadd.f32 %v508, %v536
    %541 = vrot.lane.b32.xlu0 %v438, 48
    %v542 = vpop.permute.xlu0 %541
    %543 = vrot.lane.b32.xlu0 %v439, 48
    %v544 = vpop.permute.xlu0 %543
    %545 = vrot.lane.b32.xlu0 %v446, 48
    %v546 = vpop.permute.xlu0 %545
    %547 = vrot.lane.b32.xlu0 %v447, 48
    %v548 = vpop.permute.xlu0 %547
    %vm549 = vcmp.lt.s32.totalorder %v153, 48
    %v550 = vsel %vm549, %v546, %v548
    %v551 = vsel %vm549, %v544, %v546
    %v552 = vsel %vm549, %v542, %v544
    %v553 = vsel %vm549, %v548, %v542
    %s554 = scalar_lea.vmem [#allocation6], 3
    %v555 = vld [vmem:[%s554] ss:$8 sm:$0xf]
    %v557 = vperm.slane %v555, 0
    %v558 = vperm.slane %v555, 1
    %v559 = vperm.slane %v555, 2
    %v560 = vperm.slane %v555, 3
    %v565 = vmul.f32 %v553, %v557
    %v566 = vmul.f32 %v552, %v558
    %v567 = vmul.f32 %v551, %v559
    %v568 = vmul.f32 %v550, %v560
    %v569 = vadd.f32 %v537, %v565
    %v570 = vadd.f32 %v538, %v566
    %v571 = vadd.f32 %v539, %v567
    %v572 = vadd.f32 %v540, %v568
    %573 = vrot.lane.b32.xlu0 %v438, 47
    %v574 = vpop.permute.xlu0 %573
    %575 = vrot.lane.b32.xlu0 %v439, 47
    %v576 = vpop.permute.xlu0 %575
    %577 = vrot.lane.b32.xlu0 %v446, 47
    %v578 = vpop.permute.xlu0 %577
    %579 = vrot.lane.b32.xlu0 %v447, 47
    %v580 = vpop.permute.xlu0 %579
    %vm581 = vcmp.lt.s32.totalorder %v153, 47
    %v582 = vsel %vm581, %v578, %v580
    %v583 = vsel %vm581, %v576, %v578
    %v584 = vsel %vm581, %v574, %v576
    %v585 = vsel %vm581, %v580, %v574
    %s586 = scalar_lea.vmem [#allocation6], 4
    %v587 = vld [vmem:[%s586] ss:$8 sm:$0xf]
    %v589 = vperm.slane %v587, 0
    %v590 = vperm.slane %v587, 1
    %v591 = vperm.slane %v587, 2
    %v592 = vperm.slane %v587, 3
    %v597 = vmul.f32 %v585, %v589
    %v598 = vmul.f32 %v584, %v590
    %v599 = vmul.f32 %v583, %v591
    %v600 = vmul.f32 %v582, %v592
    %v601 = vadd.f32 %v569, %v597
    %v602 = vadd.f32 %v570, %v598
    %v603 = vadd.f32 %v571, %v599
    %v604 = vadd.f32 %v572, %v600
    %605 = vrot.lane.b32.xlu0 %v438, 46
    %v606 = vpop.permute.xlu0 %605
    %607 = vrot.lane.b32.xlu0 %v439, 46
    %v608 = vpop.permute.xlu0 %607
    %609 = vrot.lane.b32.xlu0 %v446, 46
    %v610 = vpop.permute.xlu0 %609
    %611 = vrot.lane.b32.xlu0 %v447, 46
    %v612 = vpop.permute.xlu0 %611
    %vm613 = vcmp.lt.s32.totalorder %v153, 46
    %v614 = vsel %vm613, %v610, %v612
    %v615 = vsel %vm613, %v608, %v610
    %v616 = vsel %vm613, %v606, %v608
    %v617 = vsel %vm613, %v612, %v606
    %s618 = scalar_lea.vmem [#allocation6], 5
    %v619 = vld [vmem:[%s618] ss:$8 sm:$0xf]
    %v621 = vperm.slane %v619, 0
    %v622 = vperm.slane %v619, 1
    %v623 = vperm.slane %v619, 2
    %v624 = vperm.slane %v619, 3
    %v629 = vmul.f32 %v617, %v621
    %v630 = vmul.f32 %v616, %v622
    %v631 = vmul.f32 %v615, %v623
    %v632 = vmul.f32 %v614, %v624
    %v633 = vadd.f32 %v601, %v629
    %v634 = vadd.f32 %v602, %v630
    %v635 = vadd.f32 %v603, %v631
    %v636 = vadd.f32 %v604, %v632
    %637 = vrot.lane.b32.xlu0 %v438, 45
    %v638 = vpop.permute.xlu0 %637
    %639 = vrot.lane.b32.xlu0 %v439, 45
    %v640 = vpop.permute.xlu0 %639
    %641 = vrot.lane.b32.xlu0 %v446, 45
    %v642 = vpop.permute.xlu0 %641
    %643 = vrot.lane.b32.xlu0 %v447, 45
    %v644 = vpop.permute.xlu0 %643
    %vm645 = vcmp.lt.s32.totalorder %v153, 45
    %v646 = vsel %vm645, %v642, %v644
    %v647 = vsel %vm645, %v640, %v642
    %v648 = vsel %vm645, %v638, %v640
    %v649 = vsel %vm645, %v644, %v638
    %s650 = scalar_lea.vmem [#allocation6], 6
    %v651 = vld [vmem:[%s650] ss:$8 sm:$0xf]
    %v653 = vperm.slane %v651, 0
    %v654 = vperm.slane %v651, 1
    %v655 = vperm.slane %v651, 2
    %v656 = vperm.slane %v651, 3
    %v661 = vmul.f32 %v649, %v653
    %v662 = vmul.f32 %v648, %v654
    %v663 = vmul.f32 %v647, %v655
    %v664 = vmul.f32 %v646, %v656
    %v665 = vadd.f32 %v633, %v661
    %v666 = vadd.f32 %v634, %v662
    %v667 = vadd.f32 %v635, %v663
    %v668 = vadd.f32 %v636, %v664
    %669 = vrot.lane.b32.xlu0 %v438, 35
    %v670 = vpop.permute.xlu0 %669
    %671 = vrot.lane.b32.xlu0 %v439, 35
    %v672 = vpop.permute.xlu0 %671
    %673 = vrot.lane.b32.xlu0 %v446, 35
    %v674 = vpop.permute.xlu0 %673
    %675 = vrot.lane.b32.xlu0 %v447, 35
    %v676 = vpop.permute.xlu0 %675
    %vm677 = vcmp.lt.s32.totalorder %v153, 35
    %v678 = vsel %vm677, %v674, %v676
    %v679 = vsel %vm677, %v672, %v674
    %v680 = vsel %vm677, %v670, %v672
    %v681 = vsel %vm677, %v676, %v670
    %s682 = scalar_lea.vmem [#allocation6], 7
    %v683 = vld [vmem:[%s682] ss:$8 sm:$0xf]
    %v685 = vperm.slane %v683, 0
    %v686 = vperm.slane %v683, 1
    %v687 = vperm.slane %v683, 2
    %v688 = vperm.slane %v683, 3
    %v693 = vmul.f32 %v681, %v685
    %v694 = vmul.f32 %v680, %v686
    %v695 = vmul.f32 %v679, %v687
    %v696 = vmul.f32 %v678, %v688
    %697 = vrot.lane.b32.xlu0 %v438, 34
    %v698 = vpop.permute.xlu0 %697
    %699 = vrot.lane.b32.xlu0 %v439, 34
    %v700 = vpop.permute.xlu0 %699
    %701 = vrot.lane.b32.xlu0 %v446, 34
    %v702 = vpop.permute.xlu0 %701
    %703 = vrot.lane.b32.xlu0 %v447, 34
    %v704 = vpop.permute.xlu0 %703
    %vm705 = vcmp.lt.s32.totalorder %v153, 34
    %v706 = vsel %vm705, %v702, %v704
    %v707 = vsel %vm705, %v700, %v702
    %v708 = vsel %vm705, %v698, %v700
    %v709 = vsel %vm705, %v704, %v698
    %s710 = scalar_lea.vmem [#allocation6], 32
    %v711 = vld [vmem:[%s710] ss:$8 sm:$0xf]
    %v713 = vperm.slane %v711, 0
    %v714 = vperm.slane %v711, 1
    %v715 = vperm.slane %v711, 2
    %v716 = vperm.slane %v711, 3
    %v721 = vmul.f32 %v709, %v713
    %v722 = vmul.f32 %v708, %v714
    %v723 = vmul.f32 %v707, %v715
    %v724 = vmul.f32 %v706, %v716
    %v725 = vadd.f32 %v693, %v721
    %v726 = vadd.f32 %v694, %v722
    %v727 = vadd.f32 %v695, %v723
    %v728 = vadd.f32 %v696, %v724
    %729 = vrot.lane.b32.xlu0 %v438, 33
    %v730 = vpop.permute.xlu0 %729
    %731 = vrot.lane.b32.xlu0 %v439, 33
    %v732 = vpop.permute.xlu0 %731
    %733 = vrot.lane.b32.xlu0 %v446, 33
    %v734 = vpop.permute.xlu0 %733
    %735 = vrot.lane.b32.xlu0 %v447, 33
    %v736 = vpop.permute.xlu0 %735
    %vm737 = vcmp.lt.s32.totalorder %v153, 33
    %v738 = vsel %vm737, %v734, %v736
    %v739 = vsel %vm737, %v732, %v734
    %v740 = vsel %vm737, %v730, %v732
    %v741 = vsel %vm737, %v736, %v730
    %s742 = scalar_lea.vmem [#allocation6], 33
    %v743 = vld [vmem:[%s742] ss:$8 sm:$0xf]
    %v745 = vperm.slane %v743, 0
    %v746 = vperm.slane %v743, 1
    %v747 = vperm.slane %v743, 2
    %v748 = vperm.slane %v743, 3
    %v753 = vmul.f32 %v741, %v745
    %v754 = vmul.f32 %v740, %v746
    %v755 = vmul.f32 %v739, %v747
    %v756 = vmul.f32 %v738, %v748
    %v757 = vadd.f32 %v725, %v753
    %v758 = vadd.f32 %v726, %v754
    %v759 = vadd.f32 %v727, %v755
    %v760 = vadd.f32 %v728, %v756
    %761 = vrot.lane.b32.xlu0 %v438, 32
    %v762 = vpop.permute.xlu0 %761
    %763 = vrot.lane.b32.xlu0 %v439, 32
    %v764 = vpop.permute.xlu0 %763
    %765 = vrot.lane.b32.xlu0 %v446, 32
    %v766 = vpop.permute.xlu0 %765
    %767 = vrot.lane.b32.xlu0 %v447, 32
    %v768 = vpop.permute.xlu0 %767
    %vm769 = vcmp.lt.s32.totalorder %v153, 32
    %v770 = vsel %vm769, %v766, %v768
    %v771 = vsel %vm769, %v764, %v766
    %v772 = vsel %vm769, %v762, %v764
    %v773 = vsel %vm769, %v768, %v762
    %s774 = scalar_lea.vmem [#allocation6], 34
    %v775 = vld [vmem:[%s774] ss:$8 sm:$0xf]
    %v777 = vperm.slane %v775, 0
    %v778 = vperm.slane %v775, 1
    %v779 = vperm.slane %v775, 2
    %v780 = vperm.slane %v775, 3
    %v785 = vmul.f32 %v773, %v777
    %v786 = vmul.f32 %v772, %v778
    %v787 = vmul.f32 %v771, %v779
    %v788 = vmul.f32 %v770, %v780
    %v789 = vadd.f32 %v757, %v785
    %v790 = vadd.f32 %v758, %v786
    %v791 = vadd.f32 %v759, %v787
    %v792 = vadd.f32 %v760, %v788
    %793 = vrot.lane.b32.xlu0 %v438, 31
    %v794 = vpop.permute.xlu0 %793
    %795 = vrot.lane.b32.xlu0 %v439, 31
    %v796 = vpop.permute.xlu0 %795
    %797 = vrot.lane.b32.xlu0 %v446, 31
    %v798 = vpop.permute.xlu0 %797
    %799 = vrot.lane.b32.xlu0 %v447, 31
    %v800 = vpop.permute.xlu0 %799
    %vm801 = vcmp.lt.s32.totalorder %v153, 31
    %v802 = vsel %vm801, %v798, %v800
    %v803 = vsel %vm801, %v796, %v798
    %v804 = vsel %vm801, %v794, %v796
    %v805 = vsel %vm801, %v800, %v794
    %s806 = scalar_lea.vmem [#allocation6], 35
    %v807 = vld [vmem:[%s806] ss:$8 sm:$0xf]
    %v809 = vperm.slane %v807, 0
    %v810 = vperm.slane %v807, 1
    %v811 = vperm.slane %v807, 2
    %v812 = vperm.slane %v807, 3
    %v817 = vmul.f32 %v805, %v809
    %v818 = vmul.f32 %v804, %v810
    %v819 = vmul.f32 %v803, %v811
    %v820 = vmul.f32 %v802, %v812
    %v821 = vadd.f32 %v789, %v817
    %v822 = vadd.f32 %v790, %v818
    %v823 = vadd.f32 %v791, %v819
    %v824 = vadd.f32 %v792, %v820
    %825 = vrot.lane.b32.xlu0 %v438, 30
    %v826 = vpop.permute.xlu0 %825
    %827 = vrot.lane.b32.xlu0 %v439, 30
    %v828 = vpop.permute.xlu0 %827
    %829 = vrot.lane.b32.xlu0 %v446, 30
    %v830 = vpop.permute.xlu0 %829
    %831 = vrot.lane.b32.xlu0 %v447, 30
    %v832 = vpop.permute.xlu0 %831
    %vm833 = vcmp.lt.s32.totalorder %v153, 30
    %v834 = vsel %vm833, %v830, %v832
    %v835 = vsel %vm833, %v828, %v830
    %v836 = vsel %vm833, %v826, %v828
    %v837 = vsel %vm833, %v832, %v826
    %s838 = scalar_lea.vmem [#allocation6], 36
    %v839 = vld [vmem:[%s838] ss:$8 sm:$0xf]
    %v841 = vperm.slane %v839, 0
    %v842 = vperm.slane %v839, 1
    %v843 = vperm.slane %v839, 2
    %v844 = vperm.slane %v839, 3
    %v849 = vmul.f32 %v837, %v841
    %v850 = vmul.f32 %v836, %v842
    %v851 = vmul.f32 %v835, %v843
    %v852 = vmul.f32 %v834, %v844
    %v853 = vadd.f32 %v821, %v849
    %v854 = vadd.f32 %v822, %v850
    %v855 = vadd.f32 %v823, %v851
    %v856 = vadd.f32 %v824, %v852
    %857 = vrot.lane.b32.xlu0 %v438, 29
    %v858 = vpop.permute.xlu0 %857
    %859 = vrot.lane.b32.xlu0 %v439, 29
    %v860 = vpop.permute.xlu0 %859
    %861 = vrot.lane.b32.xlu0 %v446, 29
    %v862 = vpop.permute.xlu0 %861
    %863 = vrot.lane.b32.xlu0 %v447, 29
    %v864 = vpop.permute.xlu0 %863
    %vm865 = vcmp.lt.s32.totalorder %v153, 29
    %v866 = vsel %vm865, %v862, %v864
    %v867 = vsel %vm865, %v860, %v862
    %v868 = vsel %vm865, %v858, %v860
    %v869 = vsel %vm865, %v864, %v858
    %s870 = scalar_lea.vmem [#allocation6], 37
    %v871 = vld [vmem:[%s870] ss:$8 sm:$0xf]
    %v873 = vperm.slane %v871, 0
    %v874 = vperm.slane %v871, 1
    %v875 = vperm.slane %v871, 2
    %v876 = vperm.slane %v871, 3
    %v881 = vmul.f32 %v869, %v873
    %v882 = vmul.f32 %v868, %v874
    %v883 = vmul.f32 %v867, %v875
    %v884 = vmul.f32 %v866, %v876
    %v885 = vadd.f32 %v853, %v881
    %v886 = vadd.f32 %v854, %v882
    %v887 = vadd.f32 %v855, %v883
    %v888 = vadd.f32 %v856, %v884
    %889 = vrot.lane.b32.xlu0 %v438, 19
    %v890 = vpop.permute.xlu0 %889
    %891 = vrot.lane.b32.xlu0 %v439, 19
    %v892 = vpop.permute.xlu0 %891
    %893 = vrot.lane.b32.xlu0 %v446, 19
    %v894 = vpop.permute.xlu0 %893
    %895 = vrot.lane.b32.xlu0 %v447, 19
    %v896 = vpop.permute.xlu0 %895
    %vm897 = vcmp.lt.s32.totalorder %v153, 19
    %v898 = vsel %vm897, %v894, %v896
    %v899 = vsel %vm897, %v892, %v894
    %v900 = vsel %vm897, %v890, %v892
    %v901 = vsel %vm897, %v896, %v890
    %s902 = scalar_lea.vmem [#allocation6], 38
    %v903 = vld [vmem:[%s902] ss:$8 sm:$0xf]
    %v905 = vperm.slane %v903, 0
    %v906 = vperm.slane %v903, 1
    %v907 = vperm.slane %v903, 2
    %v908 = vperm.slane %v903, 3
    %v913 = vmul.f32 %v901, %v905
    %v914 = vmul.f32 %v900, %v906
    %v915 = vmul.f32 %v899, %v907
    %v916 = vmul.f32 %v898, %v908
    %917 = vrot.lane.b32.xlu0 %v438, 18
    %v918 = vpop.permute.xlu0 %917
    %919 = vrot.lane.b32.xlu0 %v439, 18
    %v920 = vpop.permute.xlu0 %919
    %921 = vrot.lane.b32.xlu0 %v446, 18
    %v922 = vpop.permute.xlu0 %921
    %923 = vrot.lane.b32.xlu0 %v447, 18
    %v924 = vpop.permute.xlu0 %923
    %vm925 = vcmp.lt.s32.totalorder %v153, 18
    %v926 = vsel %vm925, %v922, %v924
    %v927 = vsel %vm925, %v920, %v922
    %v928 = vsel %vm925, %v918, %v920
    %v929 = vsel %vm925, %v924, %v918
    %s930 = scalar_lea.vmem [#allocation6], 39
    %v931 = vld [vmem:[%s930] ss:$8 sm:$0xf]
    %v933 = vperm.slane %v931, 0
    %v934 = vperm.slane %v931, 1
    %v935 = vperm.slane %v931, 2
    %v936 = vperm.slane %v931, 3
    %v941 = vmul.f32 %v929, %v933
    %v942 = vmul.f32 %v928, %v934
    %v943 = vmul.f32 %v927, %v935
    %v944 = vmul.f32 %v926, %v936
    %v945 = vadd.f32 %v913, %v941
    %v946 = vadd.f32 %v914, %v942
    %v947 = vadd.f32 %v915, %v943
    %v948 = vadd.f32 %v916, %v944
    %949 = vrot.lane.b32.xlu0 %v438, 17
    %v950 = vpop.permute.xlu0 %949
    %951 = vrot.lane.b32.xlu0 %v439, 17
    %v952 = vpop.permute.xlu0 %951
    %953 = vrot.lane.b32.xlu0 %v446, 17
    %v954 = vpop.permute.xlu0 %953
    %955 = vrot.lane.b32.xlu0 %v447, 17
    %v956 = vpop.permute.xlu0 %955
    %vm957 = vcmp.lt.s32.totalorder %v153, 17
    %v958 = vsel %vm957, %v954, %v956
    %v959 = vsel %vm957, %v952, %v954
    %v960 = vsel %vm957, %v950, %v952
    %v961 = vsel %vm957, %v956, %v950
    %s962 = scalar_lea.vmem [#allocation6], 64
    %v963 = vld [vmem:[%s962] ss:$8 sm:$0xf]
    %v965 = vperm.slane %v963, 0
    %v966 = vperm.slane %v963, 1
    %v967 = vperm.slane %v963, 2
    %v968 = vperm.slane %v963, 3
    %v973 = vmul.f32 %v961, %v965
    %v974 = vmul.f32 %v960, %v966
    %v975 = vmul.f32 %v959, %v967
    %v976 = vmul.f32 %v958, %v968
    %v977 = vadd.f32 %v945, %v973
    %v978 = vadd.f32 %v946, %v974
    %v979 = vadd.f32 %v947, %v975
    %v980 = vadd.f32 %v948, %v976
    %981 = vrot.lane.b32.xlu0 %v438, 16
    %v982 = vpop.permute.xlu0 %981
    %983 = vrot.lane.b32.xlu0 %v439, 16
    %v984 = vpop.permute.xlu0 %983
    %985 = vrot.lane.b32.xlu0 %v446, 16
    %v986 = vpop.permute.xlu0 %985
    %987 = vrot.lane.b32.xlu0 %v447, 16
    %v988 = vpop.permute.xlu0 %987
    %vm989 = vcmp.lt.s32.totalorder %v153, 16
    %v990 = vsel %vm989, %v986, %v988
    %v991 = vsel %vm989, %v984, %v986
    %v992 = vsel %vm989, %v982, %v984
    %v993 = vsel %vm989, %v988, %v982
    %s994 = scalar_lea.vmem [#allocation6], 65
    %v995 = vld [vmem:[%s994] ss:$8 sm:$0xf]
    %v997 = vperm.slane %v995, 0
    %v998 = vperm.slane %v995, 1
    %v999 = vperm.slane %v995, 2
    %v1000 = vperm.slane %v995, 3
    %v1005 = vmul.f32 %v993, %v997
    %v1006 = vmul.f32 %v992, %v998
    %v1007 = vmul.f32 %v991, %v999
    %v1008 = vmul.f32 %v990, %v1000
    %v1009 = vadd.f32 %v977, %v1005
    %v1010 = vadd.f32 %v978, %v1006
    %v1011 = vadd.f32 %v979, %v1007
    %v1012 = vadd.f32 %v980, %v1008
    %1013 = vrot.lane.b32.xlu0 %v438, 15
    %v1014 = vpop.permute.xlu0 %1013
    %1015 = vrot.lane.b32.xlu0 %v439, 15
    %v1016 = vpop.permute.xlu0 %1015
    %1017 = vrot.lane.b32.xlu0 %v446, 15
    %v1018 = vpop.permute.xlu0 %1017
    %1019 = vrot.lane.b32.xlu0 %v447, 15
    %v1020 = vpop.permute.xlu0 %1019
    %vm1021 = vcmp.lt.s32.totalorder %v153, 15
    %v1022 = vsel %vm1021, %v1018, %v1020
    %v1023 = vsel %vm1021, %v1016, %v1018
    %v1024 = vsel %vm1021, %v1014, %v1016
    %v1025 = vsel %vm1021, %v1020, %v1014
    %s1026 = scalar_lea.vmem [#allocation6], 66
    %v1027 = vld [vmem:[%s1026] ss:$8 sm:$0xf]
    %v1029 = vperm.slane %v1027, 0
    %v1030 = vperm.slane %v1027, 1
    %v1031 = vperm.slane %v1027, 2
    %v1032 = vperm.slane %v1027, 3
    %v1037 = vmul.f32 %v1025, %v1029
    %v1038 = vmul.f32 %v1024, %v1030
    %v1039 = vmul.f32 %v1023, %v1031
    %v1040 = vmul.f32 %v1022, %v1032
    %v1041 = vadd.f32 %v1009, %v1037
    %v1042 = vadd.f32 %v1010, %v1038
    %v1043 = vadd.f32 %v1011, %v1039
    %v1044 = vadd.f32 %v1012, %v1040
    %1045 = vrot.lane.b32.xlu0 %v438, 14
    %v1046 = vpop.permute.xlu0 %1045
    %1047 = vrot.lane.b32.xlu0 %v439, 14
    %v1048 = vpop.permute.xlu0 %1047
    %1049 = vrot.lane.b32.xlu0 %v446, 14
    %v1050 = vpop.permute.xlu0 %1049
    %1051 = vrot.lane.b32.xlu0 %v447, 14
    %v1052 = vpop.permute.xlu0 %1051
    %vm1053 = vcmp.lt.s32.totalorder %v153, 14
    %v1054 = vsel %vm1053, %v1050, %v1052
    %v1055 = vsel %vm1053, %v1048, %v1050
    %v1056 = vsel %vm1053, %v1046, %v1048
    %v1057 = vsel %vm1053, %v1052, %v1046
    %s1058 = scalar_lea.vmem [#allocation6], 67
    %v1059 = vld [vmem:[%s1058] ss:$8 sm:$0xf]
    %v1061 = vperm.slane %v1059, 0
    %v1062 = vperm.slane %v1059, 1
    %v1063 = vperm.slane %v1059, 2
    %v1064 = vperm.slane %v1059, 3
    %v1069 = vmul.f32 %v1057, %v1061
    %v1070 = vmul.f32 %v1056, %v1062
    %v1071 = vmul.f32 %v1055, %v1063
    %v1072 = vmul.f32 %v1054, %v1064
    %v1073 = vadd.f32 %v1041, %v1069
    %v1074 = vadd.f32 %v1042, %v1070
    %v1075 = vadd.f32 %v1043, %v1071
    %v1076 = vadd.f32 %v1044, %v1072
    %1077 = vrot.lane.b32.xlu0 %v438, 13
    %v1078 = vpop.permute.xlu0 %1077
    %1079 = vrot.lane.b32.xlu0 %v439, 13
    %v1080 = vpop.permute.xlu0 %1079
    %1081 = vrot.lane.b32.xlu0 %v446, 13
    %v1082 = vpop.permute.xlu0 %1081
    %1083 = vrot.lane.b32.xlu0 %v447, 13
    %v1084 = vpop.permute.xlu0 %1083
    %vm1085 = vcmp.lt.s32.totalorder %v153, 13
    %v1086 = vsel %vm1085, %v1082, %v1084
    %v1087 = vsel %vm1085, %v1080, %v1082
    %v1088 = vsel %vm1085, %v1078, %v1080
    %v1089 = vsel %vm1085, %v1084, %v1078
    %s1090 = scalar_lea.vmem [#allocation6], 68
    %v1091 = vld [vmem:[%s1090] ss:$8 sm:$0xf]
    %v1093 = vperm.slane %v1091, 0
    %v1094 = vperm.slane %v1091, 1
    %v1095 = vperm.slane %v1091, 2
    %v1096 = vperm.slane %v1091, 3
    %v1101 = vmul.f32 %v1089, %v1093
    %v1102 = vmul.f32 %v1088, %v1094
    %v1103 = vmul.f32 %v1087, %v1095
    %v1104 = vmul.f32 %v1086, %v1096
    %v1105 = vadd.f32 %v1073, %v1101
    %v1106 = vadd.f32 %v1074, %v1102
    %v1107 = vadd.f32 %v1075, %v1103
    %v1108 = vadd.f32 %v1076, %v1104
    %1109 = vrot.lane.b32.xlu0 %v438, 3
    %v1110 = vpop.permute.xlu0 %1109
    %1111 = vrot.lane.b32.xlu0 %v439, 3
    %v1112 = vpop.permute.xlu0 %1111
    %1113 = vrot.lane.b32.xlu0 %v446, 3
    %v1114 = vpop.permute.xlu0 %1113
    %1115 = vrot.lane.b32.xlu0 %v447, 3
    %v1116 = vpop.permute.xlu0 %1115
    %vm1117 = vcmp.lt.s32.totalorder %v153, 3
    %v1118 = vsel %vm1117, %v1114, %v1116
    %v1119 = vsel %vm1117, %v1112, %v1114
    %v1120 = vsel %vm1117, %v1110, %v1112
    %v1121 = vsel %vm1117, %v1116, %v1110
    %s1122 = scalar_lea.vmem [#allocation6], 69
    %v1123 = vld [vmem:[%s1122] ss:$8 sm:$0xf]
    %v1125 = vperm.slane %v1123, 0
    %v1126 = vperm.slane %v1123, 1
    %v1127 = vperm.slane %v1123, 2
    %v1128 = vperm.slane %v1123, 3
    %v1133 = vmul.f32 %v1121, %v1125
    %v1134 = vmul.f32 %v1120, %v1126
    %v1135 = vmul.f32 %v1119, %v1127
    %v1136 = vmul.f32 %v1118, %v1128
    %1137 = vrot.lane.b32.xlu0 %v438, 2
    %v1138 = vpop.permute.xlu0 %1137
    %1139 = vrot.lane.b32.xlu0 %v439, 2
    %v1140 = vpop.permute.xlu0 %1139
    %1141 = vrot.lane.b32.xlu0 %v446, 2
    %v1142 = vpop.permute.xlu0 %1141
    %1143 = vrot.lane.b32.xlu0 %v447, 2
    %v1144 = vpop.permute.xlu0 %1143
    %vm1145 = vcmp.lt.s32.totalorder %v153, 2
    %v1146 = vsel %vm1145, %v1142, %v1144
    %v1147 = vsel %vm1145, %v1140, %v1142
    %v1148 = vsel %vm1145, %v1138, %v1140
    %v1149 = vsel %vm1145, %v1144, %v1138
    %s1150 = scalar_lea.vmem [#allocation6], 70
    %v1151 = vld [vmem:[%s1150] ss:$8 sm:$0xf]
    %v1153 = vperm.slane %v1151, 0
    %v1154 = vperm.slane %v1151, 1
    %v1155 = vperm.slane %v1151, 2
    %v1156 = vperm.slane %v1151, 3
    %v1161 = vmul.f32 %v1149, %v1153
    %v1162 = vmul.f32 %v1148, %v1154
    %v1163 = vmul.f32 %v1147, %v1155
    %v1164 = vmul.f32 %v1146, %v1156
    %v1165 = vadd.f32 %v1133, %v1161
    %v1166 = vadd.f32 %v1134, %v1162
    %v1167 = vadd.f32 %v1135, %v1163
    %v1168 = vadd.f32 %v1136, %v1164
    %1169 = vrot.lane.b32.xlu0 %v438, 1
    %v1170 = vpop.permute.xlu0 %1169
    %1171 = vrot.lane.b32.xlu0 %v439, 1
    %v1172 = vpop.permute.xlu0 %1171
    %1173 = vrot.lane.b32.xlu0 %v446, 1
    %v1174 = vpop.permute.xlu0 %1173
    %1175 = vrot.lane.b32.xlu0 %v447, 1
    %v1176 = vpop.permute.xlu0 %1175
    %vm1177 = vcmp.lt.s32.totalorder %v153, 1
    %v1178 = vsel %vm1177, %v1174, %v1176
    %v1179 = vsel %vm1177, %v1172, %v1174
    %v1180 = vsel %vm1177, %v1170, %v1172
    %v1181 = vsel %vm1177, %v1176, %v1170
    %s1182 = scalar_lea.vmem [#allocation6], 71
    %v1183 = vld [vmem:[%s1182] ss:$8 sm:$0xf]
    %v1185 = vperm.slane %v1183, 0
    %v1186 = vperm.slane %v1183, 1
    %v1187 = vperm.slane %v1183, 2
    %v1188 = vperm.slane %v1183, 3
    %v1193 = vmul.f32 %v1181, %v1185
    %v1194 = vmul.f32 %v1180, %v1186
    %v1195 = vmul.f32 %v1179, %v1187
    %v1196 = vmul.f32 %v1178, %v1188
    %v1197 = vadd.f32 %v1165, %v1193
    %v1198 = vadd.f32 %v1166, %v1194
    %v1199 = vadd.f32 %v1167, %v1195
    %v1200 = vadd.f32 %v1168, %v1196
    %s1201 = scalar_lea.vmem [#allocation6], 96
    %v1202 = vld [vmem:[%s1201] ss:$8 sm:$0xf]
    %v1204 = vperm.slane %v1202, 0
    %v1205 = vperm.slane %v1202, 1
    %v1206 = vperm.slane %v1202, 2
    %v1207 = vperm.slane %v1202, 3
    %v1212 = vmul.f32 %v438, %v1204
    %v1213 = vmul.f32 %v439, %v1205
    %v1214 = vmul.f32 %v446, %v1206
    %v1215 = vmul.f32 %v447, %v1207
    %v1216 = vadd.f32 %v1197, %v1212
    %v1217 = vadd.f32 %v1198, %v1213
    %v1218 = vadd.f32 %v1199, %v1214
    %v1219 = vadd.f32 %v1200, %v1215
    %1220 = vrot.lane.b32.xlu0 %v438, 127
    %v1221 = vpop.permute.xlu0 %1220
    %1222 = vrot.lane.b32.xlu0 %v439, 127
    %v1223 = vpop.permute.xlu0 %1222
    %1224 = vrot.lane.b32.xlu0 %v446, 127
    %v1225 = vpop.permute.xlu0 %1224
    %1226 = vrot.lane.b32.xlu0 %v447, 127
    %v1227 = vpop.permute.xlu0 %1226
    %vm1228 = vcmp.lt.s32.totalorder %v153, 127
    %v1229 = vsel %vm1228, %v1225, %v1227
    %v1230 = vsel %vm1228, %v1223, %v1225
    %v1231 = vsel %vm1228, %v1221, %v1223
    %v1232 = vsel %vm1228, %v1227, %v1221
    %s1233 = scalar_lea.vmem [#allocation6], 97
    %v1234 = vld [vmem:[%s1233] ss:$8 sm:$0xf]
    %v1236 = vperm.slane %v1234, 0
    %v1237 = vperm.slane %v1234, 1
    %v1238 = vperm.slane %v1234, 2
    %v1239 = vperm.slane %v1234, 3
    %v1244 = vmul.f32 %v1231, %v1236
    %v1245 = vmul.f32 %v1230, %v1237
    %v1246 = vmul.f32 %v1229, %v1238
    %v1247 = vmul.f32 %v1232, %v1239
    %v1248 = vadd.f32 %v1216, %v1244
    %v1249 = vadd.f32 %v1217, %v1245
    %v1250 = vadd.f32 %v1218, %v1246
    %v1251 = vadd.f32 %v1219, %v1247
    %1252 = vrot.lane.b32.xlu0 %v438, 126
    %v1253 = vpop.permute.xlu0 %1252
    %1254 = vrot.lane.b32.xlu0 %v439, 126
    %v1255 = vpop.permute.xlu0 %1254
    %1256 = vrot.lane.b32.xlu0 %v446, 126
    %v1257 = vpop.permute.xlu0 %1256
    %1258 = vrot.lane.b32.xlu0 %v447, 126
    %v1259 = vpop.permute.xlu0 %1258
    %vm1260 = vcmp.lt.s32.totalorder %v153, 126
    %v1261 = vsel %vm1260, %v1257, %v1259
    %v1262 = vsel %vm1260, %v1255, %v1257
    %v1263 = vsel %vm1260, %v1253, %v1255
    %v1264 = vsel %vm1260, %v1259, %v1253
    %s1265 = scalar_lea.vmem [#allocation6], 98
    %v1266 = vld [vmem:[%s1265] ss:$8 sm:$0xf]
    %v1268 = vperm.slane %v1266, 0
    %v1269 = vperm.slane %v1266, 1
    %v1270 = vperm.slane %v1266, 2
    %v1271 = vperm.slane %v1266, 3
    %v1276 = vmul.f32 %v1263, %v1268
    %v1277 = vmul.f32 %v1262, %v1269
    %v1278 = vmul.f32 %v1261, %v1270
    %v1279 = vmul.f32 %v1264, %v1271
    %v1280 = vadd.f32 %v1248, %v1276
    %v1281 = vadd.f32 %v1249, %v1277
    %v1282 = vadd.f32 %v1250, %v1278
    %v1283 = vadd.f32 %v1251, %v1279
    %1284 = vrot.lane.b32.xlu0 %v438, 125
    %v1285 = vpop.permute.xlu0 %1284
    %1286 = vrot.lane.b32.xlu0 %v439, 125
    %v1287 = vpop.permute.xlu0 %1286
    %1288 = vrot.lane.b32.xlu0 %v446, 125
    %v1289 = vpop.permute.xlu0 %1288
    %1290 = vrot.lane.b32.xlu0 %v447, 125
    %v1291 = vpop.permute.xlu0 %1290
    %vm1292 = vcmp.lt.s32.totalorder %v153, 125
    %v1293 = vsel %vm1292, %v1289, %v1291
    %v1294 = vsel %vm1292, %v1287, %v1289
    %v1295 = vsel %vm1292, %v1285, %v1287
    %v1296 = vsel %vm1292, %v1291, %v1285
    %s1297 = scalar_lea.vmem [#allocation6], 99
    %v1298 = vld [vmem:[%s1297] ss:$8 sm:$0xf]
    %v1300 = vperm.slane %v1298, 0
    %v1301 = vperm.slane %v1298, 1
    %v1302 = vperm.slane %v1298, 2
    %v1303 = vperm.slane %v1298, 3
    %v1308 = vmul.f32 %v1295, %v1300
    %v1309 = vmul.f32 %v1294, %v1301
    %v1310 = vmul.f32 %v1293, %v1302
    %v1311 = vmul.f32 %v1296, %v1303
    %v1312 = vadd.f32 %v1280, %v1308
    %v1313 = vadd.f32 %v1281, %v1309
    %v1314 = vadd.f32 %v1282, %v1310
    %v1315 = vadd.f32 %v1283, %v1311
    %1316 = vrot.lane.b32.xlu0 %v438, 115
    %v1317 = vpop.permute.xlu0 %1316
    %1318 = vrot.lane.b32.xlu0 %v439, 115
    %v1319 = vpop.permute.xlu0 %1318
    %1320 = vrot.lane.b32.xlu0 %v446, 115
    %v1321 = vpop.permute.xlu0 %1320
    %1322 = vrot.lane.b32.xlu0 %v447, 115
    %v1323 = vpop.permute.xlu0 %1322
    %vm1324 = vcmp.lt.s32.totalorder %v153, 115
    %v1325 = vsel %vm1324, %v1321, %v1323
    %v1326 = vsel %vm1324, %v1319, %v1321
    %v1327 = vsel %vm1324, %v1317, %v1319
    %v1328 = vsel %vm1324, %v1323, %v1317
    %s1329 = scalar_lea.vmem [#allocation6], 100
    %v1330 = vld [vmem:[%s1329] ss:$8 sm:$0xf]
    %v1332 = vperm.slane %v1330, 0
    %v1333 = vperm.slane %v1330, 1
    %v1334 = vperm.slane %v1330, 2
    %v1335 = vperm.slane %v1330, 3
    %v1340 = vmul.f32 %v1327, %v1332
    %v1341 = vmul.f32 %v1326, %v1333
    %v1342 = vmul.f32 %v1325, %v1334
    %v1343 = vmul.f32 %v1328, %v1335
    %1344 = vrot.lane.b32.xlu0 %v438, 114
    %v1345 = vpop.permute.xlu0 %1344
    %1346 = vrot.lane.b32.xlu0 %v439, 114
    %v1347 = vpop.permute.xlu0 %1346
    %1348 = vrot.lane.b32.xlu0 %v446, 114
    %v1349 = vpop.permute.xlu0 %1348
    %1350 = vrot.lane.b32.xlu0 %v447, 114
    %v1351 = vpop.permute.xlu0 %1350
    %vm1352 = vcmp.lt.s32.totalorder %v153, 114
    %v1353 = vsel %vm1352, %v1349, %v1351
    %v1354 = vsel %vm1352, %v1347, %v1349
    %v1355 = vsel %vm1352, %v1345, %v1347
    %v1356 = vsel %vm1352, %v1351, %v1345
    %s1357 = scalar_lea.vmem [#allocation6], 101
    %v1358 = vld [vmem:[%s1357] ss:$8 sm:$0xf]
    %v1360 = vperm.slane %v1358, 0
    %v1361 = vperm.slane %v1358, 1
    %v1362 = vperm.slane %v1358, 2
    %v1363 = vperm.slane %v1358, 3
    %v1368 = vmul.f32 %v1355, %v1360
    %v1369 = vmul.f32 %v1354, %v1361
    %v1370 = vmul.f32 %v1353, %v1362
    %v1371 = vmul.f32 %v1356, %v1363
    %v1372 = vadd.f32 %v1340, %v1368
    %v1373 = vadd.f32 %v1341, %v1369
    %v1374 = vadd.f32 %v1342, %v1370
    %v1375 = vadd.f32 %v1343, %v1371
    %1376 = vrot.lane.b32.xlu0 %v438, 113
    %v1377 = vpop.permute.xlu0 %1376
    %1378 = vrot.lane.b32.xlu0 %v439, 113
    %v1379 = vpop.permute.xlu0 %1378
    %1380 = vrot.lane.b32.xlu0 %v446, 113
    %v1381 = vpop.permute.xlu0 %1380
    %1382 = vrot.lane.b32.xlu0 %v447, 113
    %v1383 = vpop.permute.xlu0 %1382
    %vm1384 = vcmp.lt.s32.totalorder %v153, 113
    %v1385 = vsel %vm1384, %v1381, %v1383
    %v1386 = vsel %vm1384, %v1379, %v1381
    %v1387 = vsel %vm1384, %v1377, %v1379
    %v1388 = vsel %vm1384, %v1383, %v1377
    %s1389 = scalar_lea.vmem [#allocation6], 102
    %v1390 = vld [vmem:[%s1389] ss:$8 sm:$0xf]
    %v1392 = vperm.slane %v1390, 0
    %v1393 = vperm.slane %v1390, 1
    %v1394 = vperm.slane %v1390, 2
    %v1395 = vperm.slane %v1390, 3
    %v1400 = vmul.f32 %v1387, %v1392
    %v1401 = vmul.f32 %v1386, %v1393
    %v1402 = vmul.f32 %v1385, %v1394
    %v1403 = vmul.f32 %v1388, %v1395
    %v1404 = vadd.f32 %v1372, %v1400
    %v1405 = vadd.f32 %v1373, %v1401
    %v1406 = vadd.f32 %v1374, %v1402
    %v1407 = vadd.f32 %v1375, %v1403
    %1408 = vrot.lane.b32.xlu0 %v438, 112
    %v1409 = vpop.permute.xlu0 %1408
    %1410 = vrot.lane.b32.xlu0 %v439, 112
    %v1411 = vpop.permute.xlu0 %1410
    %1412 = vrot.lane.b32.xlu0 %v446, 112
    %v1413 = vpop.permute.xlu0 %1412
    %1414 = vrot.lane.b32.xlu0 %v447, 112
    %v1415 = vpop.permute.xlu0 %1414
    %vm1416 = vcmp.lt.s32.totalorder %v153, 112
    %v1417 = vsel %vm1416, %v1413, %v1415
    %v1418 = vsel %vm1416, %v1411, %v1413
    %v1419 = vsel %vm1416, %v1409, %v1411
    %v1420 = vsel %vm1416, %v1415, %v1409
    %s1421 = scalar_lea.vmem [#allocation6], 103
    %v1422 = vld [vmem:[%s1421] ss:$8 sm:$0xf]
    %v1424 = vperm.slane %v1422, 0
    %v1425 = vperm.slane %v1422, 1
    %v1426 = vperm.slane %v1422, 2
    %v1427 = vperm.slane %v1422, 3
    %v1432 = vmul.f32 %v1419, %v1424
    %v1433 = vmul.f32 %v1418, %v1425
    %v1434 = vmul.f32 %v1417, %v1426
    %v1435 = vmul.f32 %v1420, %v1427
    %v1436 = vadd.f32 %v1404, %v1432
    %v1437 = vadd.f32 %v1405, %v1433
    %v1438 = vadd.f32 %v1406, %v1434
    %v1439 = vadd.f32 %v1407, %v1435
    %1440 = vrot.lane.b32.xlu0 %v438, 111
    %v1441 = vpop.permute.xlu0 %1440
    %1442 = vrot.lane.b32.xlu0 %v439, 111
    %v1443 = vpop.permute.xlu0 %1442
    %1444 = vrot.lane.b32.xlu0 %v446, 111
    %v1445 = vpop.permute.xlu0 %1444
    %1446 = vrot.lane.b32.xlu0 %v447, 111
    %v1447 = vpop.permute.xlu0 %1446
    %vm1448 = vcmp.lt.s32.totalorder %v153, 111
    %v1449 = vsel %vm1448, %v1445, %v1447
    %v1450 = vsel %vm1448, %v1443, %v1445
    %v1451 = vsel %vm1448, %v1441, %v1443
    %v1452 = vsel %vm1448, %v1447, %v1441
    %s1453 = scalar_lea.vmem [#allocation6], 128
    %v1454 = vld [vmem:[%s1453] ss:$8 sm:$0xf]
    %v1456 = vperm.slane %v1454, 0
    %v1457 = vperm.slane %v1454, 1
    %v1458 = vperm.slane %v1454, 2
    %v1459 = vperm.slane %v1454, 3
    %v1464 = vmul.f32 %v1451, %v1456
    %v1465 = vmul.f32 %v1450, %v1457
    %v1466 = vmul.f32 %v1449, %v1458
    %v1467 = vmul.f32 %v1452, %v1459
    %v1468 = vadd.f32 %v1436, %v1464
    %v1469 = vadd.f32 %v1437, %v1465
    %v1470 = vadd.f32 %v1438, %v1466
    %v1471 = vadd.f32 %v1439, %v1467
    %1472 = vrot.lane.b32.xlu0 %v438, 110
    %v1473 = vpop.permute.xlu0 %1472
    %1474 = vrot.lane.b32.xlu0 %v439, 110
    %v1475 = vpop.permute.xlu0 %1474
    %1476 = vrot.lane.b32.xlu0 %v446, 110
    %v1477 = vpop.permute.xlu0 %1476
    %1478 = vrot.lane.b32.xlu0 %v447, 110
    %v1479 = vpop.permute.xlu0 %1478
    %vm1480 = vcmp.lt.s32.totalorder %v153, 110
    %v1481 = vsel %vm1480, %v1477, %v1479
    %v1482 = vsel %vm1480, %v1475, %v1477
    %v1483 = vsel %vm1480, %v1473, %v1475
    %v1484 = vsel %vm1480, %v1479, %v1473
    %s1485 = scalar_lea.vmem [#allocation6], 129
    %v1486 = vld [vmem:[%s1485] ss:$8 sm:$0xf]
    %v1488 = vperm.slane %v1486, 0
    %v1489 = vperm.slane %v1486, 1
    %v1490 = vperm.slane %v1486, 2
    %v1491 = vperm.slane %v1486, 3
    %v1496 = vmul.f32 %v1483, %v1488
    %v1497 = vmul.f32 %v1482, %v1489
    %v1498 = vmul.f32 %v1481, %v1490
    %v1499 = vmul.f32 %v1484, %v1491
    %v1500 = vadd.f32 %v1468, %v1496
    %v1501 = vadd.f32 %v1469, %v1497
    %v1502 = vadd.f32 %v1470, %v1498
    %v1503 = vadd.f32 %v1471, %v1499
    %1504 = vrot.lane.b32.xlu0 %v438, 109
    %v1505 = vpop.permute.xlu0 %1504
    %1506 = vrot.lane.b32.xlu0 %v439, 109
    %v1507 = vpop.permute.xlu0 %1506
    %1508 = vrot.lane.b32.xlu0 %v446, 109
    %v1509 = vpop.permute.xlu0 %1508
    %1510 = vrot.lane.b32.xlu0 %v447, 109
    %v1511 = vpop.permute.xlu0 %1510
    %vm1512 = vcmp.lt.s32.totalorder %v153, 109
    %v1513 = vsel %vm1512, %v1509, %v1511
    %v1514 = vsel %vm1512, %v1507, %v1509
    %v1515 = vsel %vm1512, %v1505, %v1507
    %v1516 = vsel %vm1512, %v1511, %v1505
    %s1517 = scalar_lea.vmem [#allocation6], 130
    %v1518 = vld [vmem:[%s1517] ss:$8 sm:$0xf]
    %v1520 = vperm.slane %v1518, 0
    %v1521 = vperm.slane %v1518, 1
    %v1522 = vperm.slane %v1518, 2
    %v1523 = vperm.slane %v1518, 3
    %v1528 = vmul.f32 %v1515, %v1520
    %v1529 = vmul.f32 %v1514, %v1521
    %v1530 = vmul.f32 %v1513, %v1522
    %v1531 = vmul.f32 %v1516, %v1523
    %v1532 = vadd.f32 %v1500, %v1528
    %v1533 = vadd.f32 %v1501, %v1529
    %v1534 = vadd.f32 %v1502, %v1530
    %v1535 = vadd.f32 %v1503, %v1531
    %1536 = vrot.lane.b32.xlu0 %v438, 99
    %v1537 = vpop.permute.xlu0 %1536
    %1538 = vrot.lane.b32.xlu0 %v439, 99
    %v1539 = vpop.permute.xlu0 %1538
    %1540 = vrot.lane.b32.xlu0 %v446, 99
    %v1541 = vpop.permute.xlu0 %1540
    %1542 = vrot.lane.b32.xlu0 %v447, 99
    %v1543 = vpop.permute.xlu0 %1542
    %vm1544 = vcmp.lt.s32.totalorder %v153, 99
    %v1545 = vsel %vm1544, %v1541, %v1543
    %v1546 = vsel %vm1544, %v1539, %v1541
    %v1547 = vsel %vm1544, %v1537, %v1539
    %v1548 = vsel %vm1544, %v1543, %v1537
    %s1549 = scalar_lea.vmem [#allocation6], 131
    %v1550 = vld [vmem:[%s1549] ss:$8 sm:$0xf]
    %v1552 = vperm.slane %v1550, 0
    %v1553 = vperm.slane %v1550, 1
    %v1554 = vperm.slane %v1550, 2
    %v1555 = vperm.slane %v1550, 3
    %v1560 = vmul.f32 %v1547, %v1552
    %v1561 = vmul.f32 %v1546, %v1553
    %v1562 = vmul.f32 %v1545, %v1554
    %v1563 = vmul.f32 %v1548, %v1555
    %1564 = vrot.lane.b32.xlu0 %v438, 98
    %v1565 = vpop.permute.xlu0 %1564
    %1566 = vrot.lane.b32.xlu0 %v439, 98
    %v1567 = vpop.permute.xlu0 %1566
    %1568 = vrot.lane.b32.xlu0 %v446, 98
    %v1569 = vpop.permute.xlu0 %1568
    %1570 = vrot.lane.b32.xlu0 %v447, 98
    %v1571 = vpop.permute.xlu0 %1570
    %vm1572 = vcmp.lt.s32.totalorder %v153, 98
    %v1573 = vsel %vm1572, %v1569, %v1571
    %v1574 = vsel %vm1572, %v1567, %v1569
    %v1575 = vsel %vm1572, %v1565, %v1567
    %v1576 = vsel %vm1572, %v1571, %v1565
    %s1577 = scalar_lea.vmem [#allocation6], 132
    %v1578 = vld [vmem:[%s1577] ss:$8 sm:$0xf]
    %v1580 = vperm.slane %v1578, 0
    %v1581 = vperm.slane %v1578, 1
    %v1582 = vperm.slane %v1578, 2
    %v1583 = vperm.slane %v1578, 3
    %v1588 = vmul.f32 %v1575, %v1580
    %v1589 = vmul.f32 %v1574, %v1581
    %v1590 = vmul.f32 %v1573, %v1582
    %v1591 = vmul.f32 %v1576, %v1583
    %v1592 = vadd.f32 %v1560, %v1588
    %v1593 = vadd.f32 %v1561, %v1589
    %v1594 = vadd.f32 %v1562, %v1590
    %v1595 = vadd.f32 %v1563, %v1591
    %1596 = vrot.lane.b32.xlu0 %v438, 97
    %v1597 = vpop.permute.xlu0 %1596
    %1598 = vrot.lane.b32.xlu0 %v439, 97
    %v1599 = vpop.permute.xlu0 %1598
    %1600 = vrot.lane.b32.xlu0 %v446, 97
    %v1601 = vpop.permute.xlu0 %1600
    %1602 = vrot.lane.b32.xlu0 %v447, 97
    %v1603 = vpop.permute.xlu0 %1602
    %vm1604 = vcmp.lt.s32.totalorder %v153, 97
    %v1605 = vsel %vm1604, %v1601, %v1603
    %v1606 = vsel %vm1604, %v1599, %v1601
    %v1607 = vsel %vm1604, %v1597, %v1599
    %v1608 = vsel %vm1604, %v1603, %v1597
    %s1609 = scalar_lea.vmem [#allocation6], 133
    %v1610 = vld [vmem:[%s1609] ss:$8 sm:$0xf]
    %v1612 = vperm.slane %v1610, 0
    %v1613 = vperm.slane %v1610, 1
    %v1614 = vperm.slane %v1610, 2
    %v1615 = vperm.slane %v1610, 3
    %v1620 = vmul.f32 %v1607, %v1612
    %v1621 = vmul.f32 %v1606, %v1613
    %v1622 = vmul.f32 %v1605, %v1614
    %v1623 = vmul.f32 %v1608, %v1615
    %v1624 = vadd.f32 %v1592, %v1620
    %v1625 = vadd.f32 %v1593, %v1621
    %v1626 = vadd.f32 %v1594, %v1622
    %v1627 = vadd.f32 %v1595, %v1623
    %1628 = vrot.lane.b32.xlu0 %v438, 96
    %v1629 = vpop.permute.xlu0 %1628
    %1630 = vrot.lane.b32.xlu0 %v439, 96
    %v1631 = vpop.permute.xlu0 %1630
    %1632 = vrot.lane.b32.xlu0 %v446, 96
    %v1633 = vpop.permute.xlu0 %1632
    %1634 = vrot.lane.b32.xlu0 %v447, 96
    %v1635 = vpop.permute.xlu0 %1634
    %vm1636 = vcmp.lt.s32.totalorder %v153, 96
    %v1637 = vsel %vm1636, %v1633, %v1635
    %v1638 = vsel %vm1636, %v1631, %v1633
    %v1639 = vsel %vm1636, %v1629, %v1631
    %v1640 = vsel %vm1636, %v1635, %v1629
    %s1641 = scalar_lea.vmem [#allocation6], 134
    %v1642 = vld [vmem:[%s1641] ss:$8 sm:$0xf]
    %v1644 = vperm.slane %v1642, 0
    %v1645 = vperm.slane %v1642, 1
    %v1646 = vperm.slane %v1642, 2
    %v1647 = vperm.slane %v1642, 3
    %v1652 = vmul.f32 %v1639, %v1644
    %v1653 = vmul.f32 %v1638, %v1645
    %v1654 = vmul.f32 %v1637, %v1646
    %v1655 = vmul.f32 %v1640, %v1647
    %v1656 = vadd.f32 %v1624, %v1652
    %v1657 = vadd.f32 %v1625, %v1653
    %v1658 = vadd.f32 %v1626, %v1654
    %v1659 = vadd.f32 %v1627, %v1655
    %1660 = vrot.lane.b32.xlu0 %v438, 95
    %v1661 = vpop.permute.xlu0 %1660
    %1662 = vrot.lane.b32.xlu0 %v439, 95
    %v1663 = vpop.permute.xlu0 %1662
    %1664 = vrot.lane.b32.xlu0 %v446, 95
    %v1665 = vpop.permute.xlu0 %1664
    %1666 = vrot.lane.b32.xlu0 %v447, 95
    %v1667 = vpop.permute.xlu0 %1666
    %vm1668 = vcmp.lt.s32.totalorder %v153, 95
    %v1669 = vsel %vm1668, %v1665, %v1667
    %v1670 = vsel %vm1668, %v1663, %v1665
    %v1671 = vsel %vm1668, %v1661, %v1663
    %v1672 = vsel %vm1668, %v1667, %v1661
    %s1673 = scalar_lea.vmem [#allocation6], 135
    %v1674 = vld [vmem:[%s1673] ss:$8 sm:$0xf]
    %v1676 = vperm.slane %v1674, 0
    %v1677 = vperm.slane %v1674, 1
    %v1678 = vperm.slane %v1674, 2
    %v1679 = vperm.slane %v1674, 3
    %v1684 = vmul.f32 %v1671, %v1676
    %v1685 = vmul.f32 %v1670, %v1677
    %v1686 = vmul.f32 %v1669, %v1678
    %v1687 = vmul.f32 %v1672, %v1679
    %v1688 = vadd.f32 %v1656, %v1684
    %v1689 = vadd.f32 %v1657, %v1685
    %v1690 = vadd.f32 %v1658, %v1686
    %v1691 = vadd.f32 %v1659, %v1687
    %1692 = vrot.lane.b32.xlu0 %v438, 94
    %v1693 = vpop.permute.xlu0 %1692
    %1694 = vrot.lane.b32.xlu0 %v439, 94
    %v1695 = vpop.permute.xlu0 %1694
    %1696 = vrot.lane.b32.xlu0 %v446, 94
    %v1697 = vpop.permute.xlu0 %1696
    %1698 = vrot.lane.b32.xlu0 %v447, 94
    %v1699 = vpop.permute.xlu0 %1698
    %vm1700 = vcmp.lt.s32.totalorder %v153, 94
    %v1701 = vsel %vm1700, %v1697, %v1699
    %v1702 = vsel %vm1700, %v1695, %v1697
    %v1703 = vsel %vm1700, %v1693, %v1695
    %v1704 = vsel %vm1700, %v1699, %v1693
    %s1705 = scalar_lea.vmem [#allocation6], 160
    %v1706 = vld [vmem:[%s1705] ss:$8 sm:$0xf]
    %v1708 = vperm.slane %v1706, 0
    %v1709 = vperm.slane %v1706, 1
    %v1710 = vperm.slane %v1706, 2
    %v1711 = vperm.slane %v1706, 3
    %v1716 = vmul.f32 %v1703, %v1708
    %v1717 = vmul.f32 %v1702, %v1709
    %v1718 = vmul.f32 %v1701, %v1710
    %v1719 = vmul.f32 %v1704, %v1711
    %v1720 = vadd.f32 %v1688, %v1716
    %v1721 = vadd.f32 %v1689, %v1717
    %v1722 = vadd.f32 %v1690, %v1718
    %v1723 = vadd.f32 %v1691, %v1719
    %1724 = vrot.lane.b32.xlu0 %v438, 93
    %v1725 = vpop.permute.xlu0 %1724
    %1726 = vrot.lane.b32.xlu0 %v439, 93
    %v1727 = vpop.permute.xlu0 %1726
    %1728 = vrot.lane.b32.xlu0 %v446, 93
    %v1729 = vpop.permute.xlu0 %1728
    %1730 = vrot.lane.b32.xlu0 %v447, 93
    %v1731 = vpop.permute.xlu0 %1730
    %vm1732 = vcmp.lt.s32.totalorder %v153, 93
    %v1733 = vsel %vm1732, %v1729, %v1731
    %v1734 = vsel %vm1732, %v1727, %v1729
    %v1735 = vsel %vm1732, %v1725, %v1727
    %v1736 = vsel %vm1732, %v1731, %v1725
    %s1737 = scalar_lea.vmem [#allocation6], 161
    %v1738 = vld [vmem:[%s1737] ss:$8 sm:$0xf]
    %v1740 = vperm.slane %v1738, 0
    %v1741 = vperm.slane %v1738, 1
    %v1742 = vperm.slane %v1738, 2
    %v1743 = vperm.slane %v1738, 3
    %v1748 = vmul.f32 %v1735, %v1740
    %v1749 = vmul.f32 %v1734, %v1741
    %v1750 = vmul.f32 %v1733, %v1742
    %v1751 = vmul.f32 %v1736, %v1743
    %v1752 = vadd.f32 %v1720, %v1748
    %v1753 = vadd.f32 %v1721, %v1749
    %v1754 = vadd.f32 %v1722, %v1750
    %v1755 = vadd.f32 %v1723, %v1751
    %1756 = vrot.lane.b32.xlu0 %v438, 83
    %v1757 = vpop.permute.xlu0 %1756
    %1758 = vrot.lane.b32.xlu0 %v439, 83
    %v1759 = vpop.permute.xlu0 %1758
    %1760 = vrot.lane.b32.xlu0 %v446, 83
    %v1761 = vpop.permute.xlu0 %1760
    %1762 = vrot.lane.b32.xlu0 %v447, 83
    %v1763 = vpop.permute.xlu0 %1762
    %vm1764 = vcmp.lt.s32.totalorder %v153, 83
    %v1765 = vsel %vm1764, %v1761, %v1763
    %v1766 = vsel %vm1764, %v1759, %v1761
    %v1767 = vsel %vm1764, %v1757, %v1759
    %v1768 = vsel %vm1764, %v1763, %v1757
    %s1769 = scalar_lea.vmem [#allocation6], 162
    %v1770 = vld [vmem:[%s1769] ss:$8 sm:$0xf]
    %v1772 = vperm.slane %v1770, 0
    %v1773 = vperm.slane %v1770, 1
    %v1774 = vperm.slane %v1770, 2
    %v1775 = vperm.slane %v1770, 3
    %v1780 = vmul.f32 %v1767, %v1772
    %v1781 = vmul.f32 %v1766, %v1773
    %v1782 = vmul.f32 %v1765, %v1774
    %v1783 = vmul.f32 %v1768, %v1775
    %1784 = vrot.lane.b32.xlu0 %v438, 82
    %v1785 = vpop.permute.xlu0 %1784
    %1786 = vrot.lane.b32.xlu0 %v439, 82
    %v1787 = vpop.permute.xlu0 %1786
    %1788 = vrot.lane.b32.xlu0 %v446, 82
    %v1789 = vpop.permute.xlu0 %1788
    %1790 = vrot.lane.b32.xlu0 %v447, 82
    %v1791 = vpop.permute.xlu0 %1790
    %vm1792 = vcmp.lt.s32.totalorder %v153, 82
    %v1793 = vsel %vm1792, %v1789, %v1791
    %v1794 = vsel %vm1792, %v1787, %v1789
    %v1795 = vsel %vm1792, %v1785, %v1787
    %v1796 = vsel %vm1792, %v1791, %v1785
    %s1797 = scalar_lea.vmem [#allocation6], 163
    %v1798 = vld [vmem:[%s1797] ss:$8 sm:$0xf]
    %v1800 = vperm.slane %v1798, 0
    %v1801 = vperm.slane %v1798, 1
    %v1802 = vperm.slane %v1798, 2
    %v1803 = vperm.slane %v1798, 3
    %v1808 = vmul.f32 %v1795, %v1800
    %v1809 = vmul.f32 %v1794, %v1801
    %v1810 = vmul.f32 %v1793, %v1802
    %v1811 = vmul.f32 %v1796, %v1803
    %v1812 = vadd.f32 %v1780, %v1808
    %v1813 = vadd.f32 %v1781, %v1809
    %v1814 = vadd.f32 %v1782, %v1810
    %v1815 = vadd.f32 %v1783, %v1811
    %1816 = vrot.lane.b32.xlu0 %v438, 81
    %v1817 = vpop.permute.xlu0 %1816
    %1818 = vrot.lane.b32.xlu0 %v439, 81
    %v1819 = vpop.permute.xlu0 %1818
    %1820 = vrot.lane.b32.xlu0 %v446, 81
    %v1821 = vpop.permute.xlu0 %1820
    %1822 = vrot.lane.b32.xlu0 %v447, 81
    %v1823 = vpop.permute.xlu0 %1822
    %vm1824 = vcmp.lt.s32.totalorder %v153, 81
    %v1825 = vsel %vm1824, %v1821, %v1823
    %v1826 = vsel %vm1824, %v1819, %v1821
    %v1827 = vsel %vm1824, %v1817, %v1819
    %v1828 = vsel %vm1824, %v1823, %v1817
    %s1829 = scalar_lea.vmem [#allocation6], 164
    %v1830 = vld [vmem:[%s1829] ss:$8 sm:$0xf]
    %v1832 = vperm.slane %v1830, 0
    %v1833 = vperm.slane %v1830, 1
    %v1834 = vperm.slane %v1830, 2
    %v1835 = vperm.slane %v1830, 3
    %v1840 = vmul.f32 %v1827, %v1832
    %v1841 = vmul.f32 %v1826, %v1833
    %v1842 = vmul.f32 %v1825, %v1834
    %v1843 = vmul.f32 %v1828, %v1835
    %v1844 = vadd.f32 %v1812, %v1840
    %v1845 = vadd.f32 %v1813, %v1841
    %v1846 = vadd.f32 %v1814, %v1842
    %v1847 = vadd.f32 %v1815, %v1843
    %1848 = vrot.lane.b32.xlu0 %v438, 80
    %v1849 = vpop.permute.xlu0 %1848
    %1850 = vrot.lane.b32.xlu0 %v439, 80
    %v1851 = vpop.permute.xlu0 %1850
    %1852 = vrot.lane.b32.xlu0 %v446, 80
    %v1853 = vpop.permute.xlu0 %1852
    %1854 = vrot.lane.b32.xlu0 %v447, 80
    %v1855 = vpop.permute.xlu0 %1854
    %vm1856 = vcmp.lt.s32.totalorder %v153, 80
    %v1857 = vsel %vm1856, %v1853, %v1855
    %v1858 = vsel %vm1856, %v1851, %v1853
    %v1859 = vsel %vm1856, %v1849, %v1851
    %v1860 = vsel %vm1856, %v1855, %v1849
    %s1861 = scalar_lea.vmem [#allocation6], 165
    %v1862 = vld [vmem:[%s1861] ss:$8 sm:$0xf]
    %v1864 = vperm.slane %v1862, 0
    %v1865 = vperm.slane %v1862, 1
    %v1866 = vperm.slane %v1862, 2
    %v1867 = vperm.slane %v1862, 3
    %v1872 = vmul.f32 %v1859, %v1864
    %v1873 = vmul.f32 %v1858, %v1865
    %v1874 = vmul.f32 %v1857, %v1866
    %v1875 = vmul.f32 %v1860, %v1867
    %v1876 = vadd.f32 %v1844, %v1872
    %v1877 = vadd.f32 %v1845, %v1873
    %v1878 = vadd.f32 %v1846, %v1874
    %v1879 = vadd.f32 %v1847, %v1875
    %1880 = vrot.lane.b32.xlu0 %v438, 79
    %v1881 = vpop.permute.xlu0 %1880
    %1882 = vrot.lane.b32.xlu0 %v439, 79
    %v1883 = vpop.permute.xlu0 %1882
    %1884 = vrot.lane.b32.xlu0 %v446, 79
    %v1885 = vpop.permute.xlu0 %1884
    %1886 = vrot.lane.b32.xlu0 %v447, 79
    %v1887 = vpop.permute.xlu0 %1886
    %vm1888 = vcmp.lt.s32.totalorder %v153, 79
    %v1889 = vsel %vm1888, %v1885, %v1887
    %v1890 = vsel %vm1888, %v1883, %v1885
    %v1891 = vsel %vm1888, %v1881, %v1883
    %v1892 = vsel %vm1888, %v1887, %v1881
    %s1893 = scalar_lea.vmem [#allocation6], 166
    %v1894 = vld [vmem:[%s1893] ss:$8 sm:$0xf]
    %v1896 = vperm.slane %v1894, 0
    %v1897 = vperm.slane %v1894, 1
    %v1898 = vperm.slane %v1894, 2
    %v1899 = vperm.slane %v1894, 3
    %v1904 = vmul.f32 %v1891, %v1896
    %v1905 = vmul.f32 %v1890, %v1897
    %v1906 = vmul.f32 %v1889, %v1898
    %v1907 = vmul.f32 %v1892, %v1899
    %v1908 = vadd.f32 %v1876, %v1904
    %v1909 = vadd.f32 %v1877, %v1905
    %v1910 = vadd.f32 %v1878, %v1906
    %v1911 = vadd.f32 %v1879, %v1907
    %1912 = vrot.lane.b32.xlu0 %v438, 78
    %v1913 = vpop.permute.xlu0 %1912
    %1914 = vrot.lane.b32.xlu0 %v439, 78
    %v1915 = vpop.permute.xlu0 %1914
    %1916 = vrot.lane.b32.xlu0 %v446, 78
    %v1917 = vpop.permute.xlu0 %1916
    %1918 = vrot.lane.b32.xlu0 %v447, 78
    %v1919 = vpop.permute.xlu0 %1918
    %vm1920 = vcmp.lt.s32.totalorder %v153, 78
    %v1921 = vsel %vm1920, %v1917, %v1919
    %v1922 = vsel %vm1920, %v1915, %v1917
    %v1923 = vsel %vm1920, %v1913, %v1915
    %v1924 = vsel %vm1920, %v1919, %v1913
    %s1925 = scalar_lea.vmem [#allocation6], 167
    %v1926 = vld [vmem:[%s1925] ss:$8 sm:$0xf]
    %v1928 = vperm.slane %v1926, 0
    %v1929 = vperm.slane %v1926, 1
    %v1930 = vperm.slane %v1926, 2
    %v1931 = vperm.slane %v1926, 3
    %v1936 = vmul.f32 %v1923, %v1928
    %v1937 = vmul.f32 %v1922, %v1929
    %v1938 = vmul.f32 %v1921, %v1930
    %v1939 = vmul.f32 %v1924, %v1931
    %v1940 = vadd.f32 %v1908, %v1936
    %v1941 = vadd.f32 %v1909, %v1937
    %v1942 = vadd.f32 %v1910, %v1938
    %v1943 = vadd.f32 %v1911, %v1939
    %1944 = vrot.lane.b32.xlu0 %v438, 77
    %v1945 = vpop.permute.xlu0 %1944
    %1946 = vrot.lane.b32.xlu0 %v439, 77
    %v1947 = vpop.permute.xlu0 %1946
    %1948 = vrot.lane.b32.xlu0 %v446, 77
    %v1949 = vpop.permute.xlu0 %1948
    %1950 = vrot.lane.b32.xlu0 %v447, 77
    %v1951 = vpop.permute.xlu0 %1950
    %vm1952 = vcmp.lt.s32.totalorder %v153, 77
    %v1953 = vsel %vm1952, %v1949, %v1951
    %v1954 = vsel %vm1952, %v1947, %v1949
    %v1955 = vsel %vm1952, %v1945, %v1947
    %v1956 = vsel %vm1952, %v1951, %v1945
    %s1957 = scalar_lea.vmem [#allocation6], 192
    %v1958 = vld [vmem:[%s1957] ss:$8 sm:$0xf]
    %v1960 = vperm.slane %v1958, 0
    %v1961 = vperm.slane %v1958, 1
    %v1962 = vperm.slane %v1958, 2
    %v1963 = vperm.slane %v1958, 3
    %v1968 = vmul.f32 %v1955, %v1960
    %v1969 = vmul.f32 %v1954, %v1961
    %v1970 = vmul.f32 %v1953, %v1962
    %v1971 = vmul.f32 %v1956, %v1963
    %v1972 = vadd.f32 %v1940, %v1968
    %v1973 = vadd.f32 %v1941, %v1969
    %v1974 = vadd.f32 %v1942, %v1970
    %v1975 = vadd.f32 %v1943, %v1971
    %v1976 = vadd.f32 %v665, %v885
    %v1977 = vadd.f32 %v666, %v886
    %v1978 = vadd.f32 %v667, %v887
    %v1979 = vadd.f32 %v668, %v888
    %v1980 = vadd.f32 %v1976, %v1105
    %v1981 = vadd.f32 %v1977, %v1106
    %v1982 = vadd.f32 %v1978, %v1107
    %v1983 = vadd.f32 %v1979, %v1108
    %v1984 = vadd.f32 %v1980, %v1312
    %v1985 = vadd.f32 %v1981, %v1313
    %v1986 = vadd.f32 %v1982, %v1314
    %v1987 = vadd.f32 %v1983, %v1315
    %v1988 = vadd.f32 %v1984, %v1532
    %v1989 = vadd.f32 %v1985, %v1533
    %v1990 = vadd.f32 %v1986, %v1534
    %v1991 = vadd.f32 %v1987, %v1535
    %v1992 = vadd.f32 %v1988, %v1752
    %v1993 = vadd.f32 %v1989, %v1753
    %v1994 = vadd.f32 %v1990, %v1754
    %v1995 = vadd.f32 %v1991, %v1755
    %v1996 = vadd.f32 %v1992, %v1972
    %v1997 = vadd.f32 %v1993, %v1973
    %v1998 = vadd.f32 %v1994, %v1974
    %v1999 = vadd.f32 %v1995, %v1975
    %v2000 = vadd.f32 %v1996, %v1998
    %v2001 = vadd.f32 %v1997, %v1999
    %s2002 = sld [smem:[#allocation8]]
    %v2003 = vstv %s2002
    %v2004 = vmul.f32 %v2000, %v2003
    %v2005 = vmul.f32 %v2001, %v2003
    %s2006 = sld [smem:[#allocation8 + $0x1]]
    %v2007 = vstv %s2006
    %v2008 = vadd.f32 %v2004, %v2007
    %v2009 = vadd.f32 %v2005, %v2007
    %v2010 = vxor.u32 %v2008, 2147483648
    %v2011 = vxor.u32 %v2009, 2147483648
    %v2012 = vmul.f32 %v2010, 1.442695
    %v2013 = vpow.pop %v2012
    %v2014 = vmul.f32 %v2011, 1.442695
    %v2015 = vpow.pop %v2014
    %v2016 = vadd.f32 %v2013, 1.0
    %v2017 = vadd.f32 %v2015, 1.0
    %v2018 = vrcp.pop %v2016
    %v2019 = vmul.f32 %v2016, %v2018
    %v2020 = vsub.f32 1.0, %v2019
    %v2021 = vmul.f32 %v2018, %v2020
    %v2022 = vadd.f32 %v2018, %v2021
    %vm2023 = vweird.f32 %v2016
    %vm2024 = vweird.f32 %v2018
    %vm2025 = vmor %vm2023, %vm2024
    %v2026 = vsel %vm2025, %v2018, %v2022
    %v2027 = vand.u32 2147483647, %v2016
    %vm2028 = vcmp.eq.f32.partialorder %v2027, 8.507059e+37
    %v2029 = vand.u32 %v2016, 2147483648
    %v2030 = vor.u32 1.1754944e-38, %v2029
    %v2031 = vsel %vm2028, %v2030, %v2026
    %v2032 = vmul.f32 1.0, %v2031
    %v2033 = vrcp.pop %v2017
    %v2034 = vmul.f32 %v2017, %v2033
    %v2035 = vsub.f32 1.0, %v2034
    %v2036 = vmul.f32 %v2033, %v2035
    %v2037 = vadd.f32 %v2033, %v2036
    %vm2038 = vweird.f32 %v2017
    %vm2039 = vweird.f32 %v2033
    %vm2040 = vmor %vm2038, %vm2039
    %v2041 = vsel %vm2040, %v2033, %v2037
    %v2042 = vand.u32 2147483647, %v2017
    %vm2043 = vcmp.eq.f32.partialorder %v2042, 8.507059e+37
    %v2044 = vand.u32 %v2017, 2147483648
    %v2045 = vor.u32 1.1754944e-38, %v2044
    %v2046 = vsel %vm2043, %v2045, %v2041
    %v2047 = vmul.f32 1.0, %v2046
    %v2050 = vrot.slane %v2047, 7
    %vm2051 = vcmask 1040384
    %v2052 = vsel %vm2051, %v2032, %v2050
    %v2053 = vsel %vm174, %v2032, %v2050
    %v2054 = vrot.slane %v2053, 1
    %v2055 = vperm.slane %v2052, 0
    %v2056 = vperm.slane %v2052, 1
    %v2057 = vperm.slane %v2054, 0
    %v2058 = vperm.slane %v2054, 1
    %v2063 = vmul.f32 %v342, %v2055
    %v2064 = vmul.f32 %v343, %v2056
    %v2065 = vmul.f32 %v344, %v2055
    %v2066 = vmul.f32 %v345, %v2056
    %v2067 = vmul.f32 %v346, %v2055
    %v2068 = vmul.f32 %v347, %v2056
    %v2069 = vmul.f32 %v348, %v2055
    %v2070 = vmul.f32 %v349, %v2056
    %v2071 = vmul.f32 %v350, %v2057
    %v2072 = vmul.f32 %v351, %v2058
    %v2073 = vmul.f32 %v352, %v2057
    %v2074 = vmul.f32 %v353, %v2058
    %v2075 = vmul.f32 %v354, %v2057
    %v2076 = vmul.f32 %v355, %v2058
    %v2077 = vmul.f32 %v356, %v2057
    %v2078 = vmul.f32 %v357, %v2058
    %2079 = vst [vmem:[#allocation9] sm:$0xff] %v2063
    %2080 = vst [vmem:[#allocation9 + $0x8] sm:$0xff] %v2064
    %2081 = vst [vmem:[#allocation9 + $0x10] sm:$0xff] %v2065
    %2082 = vst [vmem:[#allocation9 + $0x18] sm:$0xff] %v2066
    %2083 = vst [vmem:[#allocation9 + $0x20] sm:$0xff] %v2067
    %2084 = vst [vmem:[#allocation9 + $0x28] sm:$0xff] %v2068
    %2085 = vst [vmem:[#allocation9 + $0x30] sm:$0xff] %v2069
    %2086 = vst [vmem:[#allocation9 + $0x38] sm:$0xff] %v2070
    %2087 = vst [vmem:[#allocation9 + $0x40] sm:$0xff] %v2071
    %2088 = vst [vmem:[#allocation9 + $0x48] sm:$0xff] %v2072
    %2089 = vst [vmem:[#allocation9 + $0x50] sm:$0xff] %v2073
    %2090 = vst [vmem:[#allocation9 + $0x58] sm:$0xff] %v2074
    %2091 = vst [vmem:[#allocation9 + $0x60] sm:$0xff] %v2075
    %2092 = vst [vmem:[#allocation9 + $0x68] sm:$0xff] %v2076
    %2093 = vst [vmem:[#allocation9 + $0x70] sm:$0xff] %v2077
    %2094 = vst [vmem:[#allocation9 + $0x78] sm:$0xff] %v2078
    // Predicated region
    $region42: #{tpu_custom_call.1} parent=1 // pred_check
      _
    $region43: #{tpu_custom_call.1} parent=1 // pred_check_branch
      %2096 = sbr.rel (0) target = $region45
    $region44: #{tpu_custom_call.1} parent=1 // pred_region
      %2098 = vsyncadd [#allocation4], 0
      %s2099 = sshll.u32 [#allocation9], 4
      %s2100 = int_to_ptr.vmem [resolvable:$true] %s2099
      %s2101 = sshll.u32 %s7, 4
      %s2102 = int_to_ptr.hbm [resolvable:$true] %s2101
      %2107 = dma.vmem_to_hbm [thread:$0]  %s2100, 2048, %s2102, [#allocation4], 256, 256, 16
    $region45: #{tpu_custom_call.1} parent=1 // pred_fallthru
      _
    // Predicated region
    $region46: #{tpu_custom_call.1} parent=1 // pred_check
      _
    $region47: #{tpu_custom_call.1} parent=1 // pred_check_branch
      %2109 = sbr.rel (0) target = $region49
    $region48: #{tpu_custom_call.1} parent=1 // pred_region
      %2111 = dma.done [#allocation4], 2048
    $region49: #{tpu_custom_call.1} parent=1 // pred_fallthru
      _
    %2112 = vsyncpa [#allocation3], 1
    %2113 = vsyncpa [#allocation7], 1
    %2114 = vsyncpa [#allocation4], 1
    %2115 = vsyncpa [#allocation5], 1

</llo_original>
